<compile_context>
chip_gen: v6e
topology: v6e:2x2x1
jax: 0.10.0
libtpu: 0.0.40
codegen_flags: <defaults>
</compile_context>

<pallas_src>
import functools

import jax
import jax.numpy as jnp
from jax.experimental import pallas as pl
from jax.experimental.pallas import tpu as pltpu

EPS = 1e-5  # nn.LayerNorm default

_W_NAMES = ("gw", "gb", "lw", "lb", "w12t", "b12", "w3t", "b3")


def _normalizer_kernel(
    x_ref,      # (bt, T, D)  input activations (read only at l == 0)
    gw_ref,     # (L|1, T, D) global-LN weight
    gb_ref,     # (L|1, T, D) global-LN bias
    lw_ref,     # (L|1, 1, D) local-LN weight
    lb_ref,     # (L|1, 1, D) local-LN bias
    w12_ref,    # (L|1, D, 2*Dp)  [proj_1^T | proj_2^T] fused, bf16, lane-padded
    b12_ref,    # (L|1, 1, 2*Dp)  [b1 | b2] lane-padded
    w3_ref,     # (L|1, Dp, D)    proj_3^T, bf16 (padded rows are zero)
    b3_ref,     # (L|1, 1, D)
    o_ref,      # (bt, T, D)  output; doubles as the f32 accumulator when I/O is f32
    *scratch,   # optional f32 VMEM accumulator (only when I/O dtype != f32)
    weights_resident: bool,
    use_out_as_acc: bool,
):
    l = pl.program_id(1)
    last = pl.num_programs(1) - 1
    acc_ref = o_ref if use_out_as_acc else scratch[0]
    wl = l if weights_resident else 0   # weight index: layer id or local block 0

    # Load activation from the input block only once per batch tile.
    @pl.when(l == 0)
    def _():
        acc_ref[...] = x_ref[...].astype(acc_ref.dtype)

    x = acc_ref[...].astype(jnp.float32)          # (bt, T, D)
    bt, T, D = x.shape
    Dp = w12_ref.shape[-1] // 2                   # lane-padded d_model

    gw = gw_ref[wl]                               # (T, D)
    gb = gb_ref[wl]
    lw = lw_ref[wl]                               # (1, D)
    lb = lb_ref[wl]
    w12 = w12_ref[wl]                             # (D, 2*Dp) bf16
    b12 = b12_ref[wl]                             # (1, 2*Dp)
    w3 = w3_ref[wl]                               # (Dp, D)   bf16
    b3 = b3_ref[wl]                               # (1, D)

    # ---- global LayerNorm over the flattened T*D axis (two-pass stats) ----
    inv_n = 1.0 / (T * D)
    m_g = jnp.sum(jnp.sum(x, axis=2, keepdims=True), axis=1, keepdims=True) * inv_n
    xc = x - m_g
    v_g = jnp.sum(jnp.sum(xc * xc, axis=2, keepdims=True), axis=1, keepdims=True) * inv_n
    x_g = xc * jax.lax.rsqrt(v_g + EPS) * gw + gb
    x1 = x_g + x                                  # residual #1

    # ---- local LayerNorm over D; fold (bt, T) into the matmul M dimension ----
    xf = x1.reshape(bt * T, D)
    inv_d = 1.0 / D
    m_l = jnp.sum(xf, axis=-1, keepdims=True) * inv_d
    xcl = xf - m_l
    v_l = jnp.sum(xcl * xcl, axis=-1, keepdims=True) * inv_d
    x_l = xcl * jax.lax.rsqrt(v_l + EPS) * lw + lb

    # ---- gating unit: fused proj_1 || proj_2, bf16 weights, f32 accumulation ----
    uv = jnp.dot(x_l.astype(w12.dtype), w12,
                 preferred_element_type=jnp.float32) + b12    # (bt*T, 2*Dp)
    u = uv[:, :Dp]                                # lane-aligned split (padded
    v = uv[:, Dp:]                                # lanes are exact zeros)
    g = (u * jax.nn.sigmoid(u)) * v               # SiLU(u) * v
    g = jnp.dot(g.astype(w3.dtype), w3,
                preferred_element_type=jnp.float32) + b3      # (bt*T, D)

    x_out = (g + xf).reshape(bt, T, D)            # residual #2

    if use_out_as_acc:
        # Output block index ignores the layer axis => VMEM-resident across
        # layers; it is both the accumulator and, at the end, the result.
        o_ref[...] = x_out
    else:
        @pl.when(l < last)
        def _():
            acc_ref[...] = x_out

        @pl.when(l == last)
        def _():
            o_ref[...] = x_out.astype(o_ref.dtype)


def _tpu_config():
    """Generation-aware TensorCore count and VMEM budget/limit."""
    kind = ""
    try:
        kind = jax.devices()[0].device_kind.lower()
    except Exception:
        pass
    if "v7" in kind or "7x" in kind:
        # 64 MiB physical VMEM per TC, 2 TCs/chip: never request the full 64 MiB.
        return {"num_tc": 2, "vmem_budget": 48 * 2**20, "vmem_limit": 48 * 2**20}
    if "v5" in kind or "v6" in kind:
        # 128 MiB physical VMEM, single TC.
        return {"num_tc": 1, "vmem_budget": 96 * 2**20, "vmem_limit": 96 * 2**20}
    # Unknown / older generation: stay within the default scoped VMEM.
    return {"num_tc": 1, "vmem_budget": 14 * 2**20, "vmem_limit": None}


def _pick_batch_tile(B, fits, num_tc):
    """Largest divisor of B that fits VMEM; keep >= num_tc grid steps on the
    parallel batch axis only when the chip actually has multiple TensorCores."""
    divs = sorted((d for d in range(1, B + 1) if B % d == 0), reverse=True)
    feasible = [d for d in divs if fits(d)]
    if not feasible:
        return 1
    preferred = [d for d in feasible if B // d >= num_tc]
    return preferred[0] if preferred else feasible[0]


def normalizer_forward(x, params, *, batch_tile=None):
    """Run the full Normalizer stack (all layers) in a single pallas_call."""
    B, T, D = x.shape
    L = params["gw"].shape[0]
    Dp = params["w12t"].shape[-1] // 2
    assert params["w12t"].shape == (L, D, 2 * Dp)

    cfg = _tpu_config()
    use_out_as_acc = (x.dtype == jnp.float32)

    total_w_bytes = sum(int(params[n].size) * params[n].dtype.itemsize
                        for n in _W_NAMES)
    per_layer_w_bytes = total_w_bytes // L
    # Keep the whole weight stack VMEM-resident when it is a small fraction of
    # the budget (avoids nb x L re-fetches); otherwise fall back to per-layer
    # pipelined blocks.
    weights_resident = total_w_bytes <= cfg["vmem_budget"] // 4

    itemsize = jnp.dtype(x.dtype).itemsize

    def vmem_need(bt):
        blk = bt * T * D
        need = 2 * blk * itemsize          # input block, double-buffered
        need += 2 * blk * itemsize         # output block, double-buffered
        if not use_out_as_acc:
            need += blk * 4                # f32 scratch accumulator
        need += total_w_bytes if weights_resident else 2 * per_layer_w_bytes
        return need

    if batch_tile is not None:
        bt = batch_tile
    else:
        budget = int(cfg["vmem_budget"] * 0.85)   # headroom for Mosaic internals
        bt = _pick_batch_tile(B, lambda d: vmem_need(d) <= budget, cfg["num_tc"])
    assert B % bt == 0
    nb = B // bt

    act_spec = pl.BlockSpec((bt, T, D), lambda b, l: (b, 0, 0))

    if weights_resident:
        def w_spec(shape):
            del shape
            return pl.BlockSpec(memory_space=pltpu.MemorySpace.VMEM)
    else:
        def w_spec(shape):
            zeros = (0,) * (len(shape) - 1)
            return pl.BlockSpec((1,) + shape[1:],
                                lambda b, l, _z=zeros: (l,) + _z)

    in_specs = [act_spec] + [w_spec(params[n].shape) for n in _W_NAMES]
    scratch_shapes = ([] if use_out_as_acc
                      else [pltpu.VMEM((bt, T, D), jnp.float32)])

    kernel = functools.partial(_normalizer_kernel,
                               weights_resident=weights_resident,
                               use_out_as_acc=use_out_as_acc)

    return pl.pallas_call(
        kernel,
        out_shape=jax.ShapeDtypeStruct((B, T, D), x.dtype),
        grid_spec=pltpu.PrefetchScalarGridSpec(
            num_scalar_prefetch=0,
            grid=(nb, L),
            in_specs=in_specs,
            out_specs=act_spec,
            scratch_shapes=scratch_shapes,
        ),
        compiler_params=pltpu.CompilerParams(
            dimension_semantics=("parallel", "arbitrary"),
            vmem_limit_bytes=cfg["vmem_limit"],
        ),
    )(x, *(params[n] for n in _W_NAMES))


def init_params(key, d_model, num_tokens, num_layers):
    """Per-layer weights stacked along a leading L axis.

    proj_1/proj_2 are fused into w12t = [W1^T | pad | W2^T | pad] with each
    half zero-padded to a 128-lane multiple so the in-kernel u/v split is
    always lane-aligned; w3t is padded on its input (row) dimension with
    zeros to match.  Padding is exact-zero so forward semantics are unchanged.
    """
    D, T, L = d_model, num_tokens, num_layers
    Dp = ((D + 127) // 128) * 128
    ks = jax.random.split(key, 10)
    scale = 1.0 / jnp.sqrt(D)
    w1t = jax.random.normal(ks[0], (L, D, D), jnp.float32) * scale  # proj_1.W^T
    w2t = jax.random.normal(ks[1], (L, D, D), jnp.float32) * scale  # proj_2.W^T
    w3t = jax.random.normal(ks[2], (L, D, D), jnp.float32) * scale  # proj_3.W^T
    b1 = jax.random.normal(ks[3], (L, 1, D), jnp.float32) * scale
    b2 = jax.random.normal(ks[4], (L, 1, D), jnp.float32) * scale
    b3 = jax.random.normal(ks[5], (L, 1, D), jnp.float32) * scale
    # LayerNorm affine params randomized away from the 1/0 defaults so the
    # correctness check exercises them (forward semantics unchanged).
    gw = 1.0 + 0.1 * jax.random.normal(ks[6], (L, T, D), jnp.float32)
    gb = 0.1 * jax.random.normal(ks[7], (L, T, D), jnp.float32)
    lw = 1.0 + 0.1 * jax.random.normal(ks[8], (L, 1, D), jnp.float32)
    lb = 0.1 * jax.random.normal(ks[9], (L, 1, D), jnp.float32)

    def pad_last(a, width):
        return jnp.pad(a, ((0, 0), (0, 0), (0, width - a.shape[-1])))

    w12t = jnp.concatenate([pad_last(w1t, Dp), pad_last(w2t, Dp)], axis=-1)
    b12 = jnp.concatenate([pad_last(b1, Dp), pad_last(b2, Dp)], axis=-1)
    w3t_p = jnp.pad(w3t, ((0, 0), (0, Dp - D), (0, 0)))

    return {
        "gw": gw, "gb": gb, "lw": lw, "lb": lb,
        "w12t": w12t.astype(jnp.bfloat16),     # (L, D, 2*Dp)
        "b12": b12,                            # (L, 1, 2*Dp)
        "w3t": w3t_p.astype(jnp.bfloat16),     # (L, Dp, D)
        "b3": b3,                              # (L, 1, D)
    }


# ---------- pure-JAX reference (mirrors the PyTorch module; same bf16 casts) ----------
def _ref_forward(x, params):
    B, T, D = x.shape
    L = params["gw"].shape[0]
    Dp = params["w12t"].shape[-1] // 2
    out = x.astype(jnp.float32)
    for l in range(L):
        gw = params["gw"][l].reshape(-1)
        gb = params["gb"][l].reshape(-1)
        lw = params["lw"][l, 0]
        lb = params["lb"][l, 0]
        w12 = params["w12t"][l]
        b12 = params["b12"][l, 0]
        w3 = params["w3t"][l]
        b3 = params["b3"][l, 0]

        xf = out.reshape(B, T * D)
        m = jnp.mean(xf, axis=-1, keepdims=True)
        v = jnp.mean((xf - m) ** 2, axis=-1, keepdims=True)
        xg = (xf - m) / jnp.sqrt(v + EPS) * gw + gb
        x1 = xg.reshape(B, T, D) + out

        m = jnp.mean(x1, axis=-1, keepdims=True)
        v = jnp.mean((x1 - m) ** 2, axis=-1, keepdims=True)
        xl = (x1 - m) / jnp.sqrt(v + EPS) * lw + lb

        uv = jnp.dot(xl.astype(jnp.bfloat16), w12,
                     preferred_element_type=jnp.float32) + b12
        u, vv = uv[..., :Dp], uv[..., Dp:]
        g = u * jax.nn.sigmoid(u) * vv
        g = jnp.dot(g.astype(jnp.bfloat16), w3,
                    preferred_element_type=jnp.float32) + b3
        out = g + x1
    return out


if __name__ == "__main__":
    B, T, D = 8, 8, 128      # batch, num_tokens, d_model (D % 128 == 0: lane-dense)
    num_layers = 2

    key = jax.random.PRNGKey(0)
    kx, kp = jax.random.split(key)
    x = jax.random.normal(kx, (B, T, D), dtype=jnp.float32)
    params = init_params(kp, D, T, num_layers)

    out = normalizer_forward(x, params)
    out = jax.block_until_ready(out)

    ref = _ref_forward(x, params)
    assert out.shape == (B, T, D)
    # bf16 matmul weights (applied identically in kernel and reference) =>
    # tolerance relaxed relative to a pure-f32 comparison.
    assert jnp.allclose(out, ref, atol=2e-2, rtol=2e-2), float(
        jnp.max(jnp.abs(out - ref)))

    print("KERNEL_OK")
</pallas_src>

<mosaic_0001>
module attributes {stable_mosaic.version = 11 : i64} {
  func.func @_normalizer_kernel(%arg0: i32, %arg1: i32, %arg2: memref<8x8x128xf32, #tpu.memory_space<vmem>>, %arg3: memref<2x8x128xf32, #tpu.memory_space<vmem>>, %arg4: memref<2x8x128xf32, #tpu.memory_space<vmem>>, %arg5: memref<2x1x128xf32, #tpu.memory_space<vmem>>, %arg6: memref<2x1x128xf32, #tpu.memory_space<vmem>>, %arg7: memref<2x128x256xbf16, #tpu.memory_space<vmem>>, %arg8: memref<2x1x256xf32, #tpu.memory_space<vmem>>, %arg9: memref<2x128x128xbf16, #tpu.memory_space<vmem>>, %arg10: memref<2x1x128xf32, #tpu.memory_space<vmem>>, %arg11: memref<8x8x128xf32, #tpu.memory_space<vmem>>) attributes {dimension_semantics = [#tpu.dimension_semantics<parallel>, #tpu.dimension_semantics<arbitrary>], iteration_bounds = array<i64: 1, 2>, scalar_prefetch = 0 : i64, scratch_operands = 0 : i64, tpu.core_type = #tpu.core_type<tc>, window_params = [{transform_indices = @transform_0, window_bounds = array<i64: 8, 8, 128>}, {pipeline_mode = #tpu.pipeline_mode<synchronous>, transform_indices = @transform_1, window_bounds = array<i64: 2, 8, 128>}, {pipeline_mode = #tpu.pipeline_mode<synchronous>, transform_indices = @transform_2, window_bounds = array<i64: 2, 8, 128>}, {pipeline_mode = #tpu.pipeline_mode<synchronous>, transform_indices = @transform_3, window_bounds = array<i64: 2, 1, 128>}, {pipeline_mode = #tpu.pipeline_mode<synchronous>, transform_indices = @transform_4, window_bounds = array<i64: 2, 1, 128>}, {pipeline_mode = #tpu.pipeline_mode<synchronous>, transform_indices = @transform_5, window_bounds = array<i64: 2, 128, 256>}, {pipeline_mode = #tpu.pipeline_mode<synchronous>, transform_indices = @transform_6, window_bounds = array<i64: 2, 1, 256>}, {pipeline_mode = #tpu.pipeline_mode<synchronous>, transform_indices = @transform_7, window_bounds = array<i64: 2, 128, 128>}, {pipeline_mode = #tpu.pipeline_mode<synchronous>, transform_indices = @transform_8, window_bounds = array<i64: 2, 1, 128>}, {transform_indices = @transform_9, window_bounds = array<i64: 8, 8, 128>}]} {
    %c0_i32 = arith.constant 0 : i32
    %0 = arith.cmpi eq, %arg1, %c0_i32 : i32
    %1 = arith.extui %0 : i1 to i32
    %c0_i32_0 = arith.constant 0 : i32
    %2 = arith.cmpi ne, %1, %c0_i32_0 : i32
    scf.if %2 {
      %c0_36 = arith.constant 0 : index
      %c0_37 = arith.constant 0 : index
      %c0_38 = arith.constant 0 : index
      %96 = vector.load %arg2[%c0_36, %c0_37, %c0_38] : memref<8x8x128xf32, #tpu.memory_space<vmem>>, vector<8x8x128xf32>
      %c0_39 = arith.constant 0 : index
      %c0_40 = arith.constant 0 : index
      %c0_41 = arith.constant 0 : index
      %97 = vector.load %arg11[%c0_39, %c0_40, %c0_41] : memref<8x8x128xf32, #tpu.memory_space<vmem>>, vector<8x8x128xf32>
      tpu.vector_store %arg11[%c0_39, %c0_40, %c0_41], %96 {strides = array<i32>} : memref<8x8x128xf32, #tpu.memory_space<vmem>>, vector<8x8x128xf32>,
    } else {
    }
    %c0 = arith.constant 0 : index
    %c0_1 = arith.constant 0 : index
    %c0_2 = arith.constant 0 : index
    %3 = vector.load %arg11[%c0, %c0_1, %c0_2] : memref<8x8x128xf32, #tpu.memory_space<vmem>>, vector<8x8x128xf32>
    %4 = arith.index_cast %arg1 : i32 to index
    %c0_3 = arith.constant 0 : index
    %c0_4 = arith.constant 0 : index
    %5 = vector.load %arg3[%4, %c0_3, %c0_4] : memref<2x8x128xf32, #tpu.memory_space<vmem>>, vector<1x8x128xf32>
    %6 = vector.shape_cast %5 : vector<1x8x128xf32> to vector<8x128xf32>
    %7 = arith.index_cast %arg1 : i32 to index
    %c0_5 = arith.constant 0 : index
    %c0_6 = arith.constant 0 : index
    %8 = vector.load %arg4[%7, %c0_5, %c0_6] : memref<2x8x128xf32, #tpu.memory_space<vmem>>, vector<1x8x128xf32>
    %9 = vector.shape_cast %8 : vector<1x8x128xf32> to vector<8x128xf32>
    %10 = arith.index_cast %arg1 : i32 to index
    %c0_7 = arith.constant 0 : index
    %c0_8 = arith.constant 0 : index
    %11 = vector.load %arg5[%10, %c0_7, %c0_8] : memref<2x1x128xf32, #tpu.memory_space<vmem>>, vector<1x1x128xf32>
    %12 = vector.shape_cast %11 : vector<1x1x128xf32> to vector<1x128xf32>
    %13 = arith.index_cast %arg1 : i32 to index
    %c0_9 = arith.constant 0 : index
    %c0_10 = arith.constant 0 : index
    %14 = vector.load %arg6[%13, %c0_9, %c0_10] : memref<2x1x128xf32, #tpu.memory_space<vmem>>, vector<1x1x128xf32>
    %15 = vector.shape_cast %14 : vector<1x1x128xf32> to vector<1x128xf32>
    %16 = arith.index_cast %arg1 : i32 to index
    %c0_11 = arith.constant 0 : index
    %c0_12 = arith.constant 0 : index
    %17 = vector.load %arg7[%16, %c0_11, %c0_12] : memref<2x128x256xbf16, #tpu.memory_space<vmem>>, vector<1x128x256xbf16>
    %18 = vector.shape_cast %17 : vector<1x128x256xbf16> to vector<128x256xbf16>
    %19 = arith.index_cast %arg1 : i32 to index
    %c0_13 = arith.constant 0 : index
    %c0_14 = arith.constant 0 : index
    %20 = vector.load %arg8[%19, %c0_13, %c0_14] : memref<2x1x256xf32, #tpu.memory_space<vmem>>, vector<1x1x256xf32>
    %21 = vector.shape_cast %20 : vector<1x1x256xf32> to vector<1x256xf32>
    %22 = arith.index_cast %arg1 : i32 to index
    %c0_15 = arith.constant 0 : index
    %c0_16 = arith.constant 0 : index
    %23 = vector.load %arg9[%22, %c0_15, %c0_16] : memref<2x128x128xbf16, #tpu.memory_space<vmem>>, vector<1x128x128xbf16>
    %24 = vector.shape_cast %23 : vector<1x128x128xbf16> to vector<128x128xbf16>
    %25 = arith.index_cast %arg1 : i32 to index
    %c0_17 = arith.constant 0 : index
    %c0_18 = arith.constant 0 : index
    %26 = vector.load %arg10[%25, %c0_17, %c0_18] : memref<2x1x128xf32, #tpu.memory_space<vmem>>, vector<1x1x128xf32>
    %27 = vector.shape_cast %26 : vector<1x1x128xf32> to vector<1x128xf32>
    %cst = arith.constant dense<0.000000e+00> : vector<8x8xf32>
    %28 = vector.multi_reduction <add>, %3, %cst [2] : vector<8x8x128xf32> to vector<8x8xf32>
    %29 = vector.shape_cast %28 : vector<8x8xf32> to vector<8x8x1xf32>
    %cst_19 = arith.constant dense<0.000000e+00> : vector<8x1xf32>
    %30 = vector.multi_reduction <add>, %29, %cst_19 [1] : vector<8x8x1xf32> to vector<8x1xf32>
    %31 = vector.shape_cast %30 : vector<8x1xf32> to vector<8x1x1xf32>
    %cst_20 = arith.constant 9.765625E-4 : f32
    %32 = vector.broadcast %cst_20 : f32 to vector<8x1x1xf32>
    %33 = arith.mulf %31, %32 : vector<8x1x1xf32>
    %34 = vector.broadcast %33 : vector<8x1x1xf32> to vector<8x8x128xf32>
    %35 = arith.subf %3, %34 : vector<8x8x128xf32>
    %36 = arith.mulf %35, %35 : vector<8x8x128xf32>
    %cst_21 = arith.constant dense<0.000000e+00> : vector<8x8xf32>
    %37 = vector.multi_reduction <add>, %36, %cst_21 [2] : vector<8x8x128xf32> to vector<8x8xf32>
    %38 = vector.shape_cast %37 : vector<8x8xf32> to vector<8x8x1xf32>
    %cst_22 = arith.constant dense<0.000000e+00> : vector<8x1xf32>
    %39 = vector.multi_reduction <add>, %38, %cst_22 [1] : vector<8x8x1xf32> to vector<8x1xf32>
    %40 = vector.shape_cast %39 : vector<8x1xf32> to vector<8x1x1xf32>
    %cst_23 = arith.constant 9.765625E-4 : f32
    %41 = vector.broadcast %cst_23 : f32 to vector<8x1x1xf32>
    %42 = arith.mulf %40, %41 : vector<8x1x1xf32>
    %cst_24 = arith.constant 9.99999974E-6 : f32
    %43 = vector.broadcast %cst_24 : f32 to vector<8x1x1xf32>
    %44 = arith.addf %42, %43 : vector<8x1x1xf32>
    %45 = math.rsqrt %44 : vector<8x1x1xf32>
    %46 = vector.broadcast %45 : vector<8x1x1xf32> to vector<8x8x128xf32>
    %47 = arith.mulf %35, %46 : vector<8x8x128xf32>
    %48 = vector.shape_cast %6 : vector<8x128xf32> to vector<1x8x128xf32>
    %49 = vector.broadcast %48 : vector<1x8x128xf32> to vector<8x8x128xf32>
    %50 = arith.mulf %47, %49 : vector<8x8x128xf32>
    %51 = vector.shape_cast %9 : vector<8x128xf32> to vector<1x8x128xf32>
    %52 = vector.broadcast %51 : vector<1x8x128xf32> to vector<8x8x128xf32>
    %53 = arith.addf %50, %52 : vector<8x8x128xf32>
    %54 = arith.addf %53, %3 : vector<8x8x128xf32>
    %55 = vector.shape_cast %54 : vector<8x8x128xf32> to vector<64x128xf32>
    %cst_25 = arith.constant dense<0.000000e+00> : vector<64xf32>
    %56 = vector.multi_reduction <add>, %55, %cst_25 [1] : vector<64x128xf32> to vector<64xf32>
    %57 = vector.shape_cast %56 : vector<64xf32> to vector<64x1xf32>
    %cst_26 = arith.constant 7.812500e-03 : f32
    %58 = vector.broadcast %cst_26 : f32 to vector<64x1xf32>
    %59 = arith.mulf %57, %58 : vector<64x1xf32>
    %60 = vector.broadcast %59 : vector<64x1xf32> to vector<64x128xf32>
    %61 = arith.subf %55, %60 : vector<64x128xf32>
    %62 = arith.mulf %61, %61 : vector<64x128xf32>
    %cst_27 = arith.constant dense<0.000000e+00> : vector<64xf32>
    %63 = vector.multi_reduction <add>, %62, %cst_27 [1] : vector<64x128xf32> to vector<64xf32>
    %64 = vector.shape_cast %63 : vector<64xf32> to vector<64x1xf32>
    %cst_28 = arith.constant 7.812500e-03 : f32
    %65 = vector.broadcast %cst_28 : f32 to vector<64x1xf32>
    %66 = arith.mulf %64, %65 : vector<64x1xf32>
    %cst_29 = arith.constant 9.99999974E-6 : f32
    %67 = vector.broadcast %cst_29 : f32 to vector<64x1xf32>
    %68 = arith.addf %66, %67 : vector<64x1xf32>
    %69 = math.rsqrt %68 : vector<64x1xf32>
    %70 = vector.broadcast %69 : vector<64x1xf32> to vector<64x128xf32>
    %71 = arith.mulf %61, %70 : vector<64x128xf32>
    %72 = vector.broadcast %12 : vector<1x128xf32> to vector<64x128xf32>
    %73 = arith.mulf %71, %72 : vector<64x128xf32>
    %74 = vector.broadcast %15 : vector<1x128xf32> to vector<64x128xf32>
    %75 = arith.addf %73, %74 : vector<64x128xf32>
    %76 = arith.truncf %75 : vector<64x128xf32> to vector<64x128xbf16>
    %cst_30 = arith.constant dense<0.000000e+00> : vector<64x256xf32>
    %77 = tpu.matmul %76, %18, %cst_30 {dimension_numbers = #tpu.dot_dimension_numbers<[1], [0], [0], [1], [0, 0, 1, 1], [], []>} : vector<64x128xbf16>, vector<128x256xbf16>, vector<64x256xf32> -> vector<64x256xf32>
    %78 = vector.broadcast %21 : vector<1x256xf32> to vector<64x256xf32>
    %79 = arith.addf %77, %78 : vector<64x256xf32>
    %80 = vector.extract_strided_slice %79 {offsets = [0, 0], sizes = [64, 128], strides = [1, 1]} : vector<64x256xf32> to vector<64x128xf32>
    %81 = vector.extract_strided_slice %79 {offsets = [0, 128], sizes = [64, 128], strides = [1, 1]} : vector<64x256xf32> to vector<64x128xf32>
    %82 = arith.negf %80 : vector<64x128xf32>
    %83 = math.exp %82 : vector<64x128xf32>
    %cst_31 = arith.constant 1.000000e+00 : f32
    %84 = vector.broadcast %cst_31 : f32 to vector<64x128xf32>
    %85 = arith.addf %84, %83 : vector<64x128xf32>
    %86 = arith.divf %84, %85 : vector<64x128xf32>
    %87 = arith.mulf %80, %86 : vector<64x128xf32>
    %88 = arith.mulf %87, %81 : vector<64x128xf32>
    %89 = arith.truncf %88 : vector<64x128xf32> to vector<64x128xbf16>
    %cst_32 = arith.constant dense<0.000000e+00> : vector<64x128xf32>
    %90 = tpu.matmul %89, %24, %cst_32 {dimension_numbers = #tpu.dot_dimension_numbers<[1], [0], [0], [1], [0, 0, 1, 1], [], []>} : vector<64x128xbf16>, vector<128x128xbf16>, vector<64x128xf32> -> vector<64x128xf32>
    %91 = vector.broadcast %27 : vector<1x128xf32> to vector<64x128xf32>
    %92 = arith.addf %90, %91 : vector<64x128xf32>
    %93 = arith.addf %92, %55 : vector<64x128xf32>
    %94 = vector.shape_cast %93 : vector<64x128xf32> to vector<8x8x128xf32>
    %c0_33 = arith.constant 0 : index
    %c0_34 = arith.constant 0 : index
    %c0_35 = arith.constant 0 : index
    %95 = vector.load %arg11[%c0_33, %c0_34, %c0_35] : memref<8x8x128xf32, #tpu.memory_space<vmem>>, vector<8x8x128xf32>
    tpu.vector_store %arg11[%c0_33, %c0_34, %c0_35], %94 {strides = array<i32>} : memref<8x8x128xf32, #tpu.memory_space<vmem>>, vector<8x8x128xf32>,
    return
  }
  func.func @transform_0(%arg0: i32, %arg1: i32) -> (i32, i32, i32) {
    %c0_i32 = arith.constant 0 : i32
    %c0_i32_0 = arith.constant 0 : i32
    %c0_i32_1 = arith.constant 0 : i32
    return %arg0, %c0_i32, %c0_i32_0 : i32, i32, i32
  }
  func.func @transform_1(%arg0: i32, %arg1: i32) -> (i32, i32, i32) {
    %c0_i32 = arith.constant 0 : i32
    %c0_i32_0 = arith.constant 0 : i32
    %c0_i32_1 = arith.constant 0 : i32
    %c0_i32_2 = arith.constant 0 : i32
    return %c0_i32, %c0_i32_0, %c0_i32_1 : i32, i32, i32
  }
  func.func @transform_2(%arg0: i32, %arg1: i32) -> (i32, i32, i32) {
    %c0_i32 = arith.constant 0 : i32
    %c0_i32_0 = arith.constant 0 : i32
    %c0_i32_1 = arith.constant 0 : i32
    %c0_i32_2 = arith.constant 0 : i32
    return %c0_i32, %c0_i32_0, %c0_i32_1 : i32, i32, i32
  }
  func.func @transform_3(%arg0: i32, %arg1: i32) -> (i32, i32, i32) {
    %c0_i32 = arith.constant 0 : i32
    %c0_i32_0 = arith.constant 0 : i32
    %c0_i32_1 = arith.constant 0 : i32
    %c0_i32_2 = arith.constant 0 : i32
    return %c0_i32, %c0_i32_0, %c0_i32_1 : i32, i32, i32
  }
  func.func @transform_4(%arg0: i32, %arg1: i32) -> (i32, i32, i32) {
    %c0_i32 = arith.constant 0 : i32
    %c0_i32_0 = arith.constant 0 : i32
    %c0_i32_1 = arith.constant 0 : i32
    %c0_i32_2 = arith.constant 0 : i32
    return %c0_i32, %c0_i32_0, %c0_i32_1 : i32, i32, i32
  }
  func.func @transform_5(%arg0: i32, %arg1: i32) -> (i32, i32, i32) {
    %c0_i32 = arith.constant 0 : i32
    %c0_i32_0 = arith.constant 0 : i32
    %c0_i32_1 = arith.constant 0 : i32
    %c0_i32_2 = arith.constant 0 : i32
    return %c0_i32, %c0_i32_0, %c0_i32_1 : i32, i32, i32
  }
  func.func @transform_6(%arg0: i32, %arg1: i32) -> (i32, i32, i32) {
    %c0_i32 = arith.constant 0 : i32
    %c0_i32_0 = arith.constant 0 : i32
    %c0_i32_1 = arith.constant 0 : i32
    %c0_i32_2 = arith.constant 0 : i32
    return %c0_i32, %c0_i32_0, %c0_i32_1 : i32, i32, i32
  }
  func.func @transform_7(%arg0: i32, %arg1: i32) -> (i32, i32, i32) {
    %c0_i32 = arith.constant 0 : i32
    %c0_i32_0 = arith.constant 0 : i32
    %c0_i32_1 = arith.constant 0 : i32
    %c0_i32_2 = arith.constant 0 : i32
    return %c0_i32, %c0_i32_0, %c0_i32_1 : i32, i32, i32
  }
  func.func @transform_8(%arg0: i32, %arg1: i32) -> (i32, i32, i32) {
    %c0_i32 = arith.constant 0 : i32
    %c0_i32_0 = arith.constant 0 : i32
    %c0_i32_1 = arith.constant 0 : i32
    %c0_i32_2 = arith.constant 0 : i32
    return %c0_i32, %c0_i32_0, %c0_i32_1 : i32, i32, i32
  }
  func.func @transform_9(%arg0: i32, %arg1: i32) -> (i32, i32, i32) {
    %c0_i32 = arith.constant 0 : i32
    %c0_i32_0 = arith.constant 0 : i32
    %c0_i32_1 = arith.constant 0 : i32
    return %arg0, %c0_i32, %c0_i32_0 : i32, i32, i32
  }
}

</mosaic_0001>

<llo_original>
// kernel: tpu_custom_call.1
$region0: #{tpu_custom_call.1}
  #allocation0 [shape = 'u32[]', space=smem, size = 0x4, offset = 0x4, fixed_abs, tag = 'smem constant byte address 0x4 - core index']
  #allocation1 [shape = 'u32[144,128]{1,0:T(1,128)}', space=vmem, size = 0x12000, scoped, tag = 'internal scratch']
  %s0 = inlined_call_operand.hbm [shape: f32[8,8,128], index: 0, kind: input, shape index: {}]
  %s1 = inlined_call_operand.hbm [shape: f32[2,8,128], index: 1, kind: input, shape index: {}]
  %s2 = inlined_call_operand.hbm [shape: f32[2,8,128], index: 2, kind: input, shape index: {}]
  %s3 = inlined_call_operand.vmem [shape: f32[2,1,128], index: 3, kind: input, shape index: {}]
  %s4 = inlined_call_operand.hbm [shape: f32[2,1,128], index: 4, kind: input, shape index: {}]
  %s5 = inlined_call_operand.hbm [shape: bf16[2,128,256], index: 5, kind: input, shape index: {}]
  %s6 = inlined_call_operand.vmem [shape: f32[2,1,256], index: 6, kind: input, shape index: {}]
  %s7 = inlined_call_operand.hbm [shape: bf16[2,128,128], index: 7, kind: input, shape index: {}]
  %s8 = inlined_call_operand.vmem [shape: f32[2,1,128], index: 8, kind: input, shape index: {}]
  %s9 = inlined_call_operand.hbm [shape: f32[8,8,128], index: 9, kind: output, shape index: {}]
  %s10 = sld [smem:[#allocation0]]
  $region97: #{tpu_custom_call.1} parent=0
    _
  %s12 = ssub.s32 1, %s10
  %s13 = scalar_select 0, %s12, %s10
  $region1: #{tpu_custom_call.1} parent=0
    #allocation2 [shape = 'u8[32768]{0}', space=vmem, size = 0x8000, scoped, tag = 'input window, operand 0, single buffered']
    #allocation3 [shape = 's32[2]{0}', space=sflag, size = 0x8, scoped, tag = 'scoped memory for tpu_custom_call.1']
    #allocation4 [shape = 's32[2]{0}', space=sflag, size = 0x8, scoped, tag = 'scoped memory for tpu_custom_call.1']
    #allocation5 [shape = 'u8[8192]{0}', space=vmem, size = 0x2000, scoped, tag = 'input window, operand 1, single buffered']
    #allocation6 [shape = 's32[1]{0}', space=sflag, size = 0x4, scoped, tag = 'scoped memory for tpu_custom_call.1']
    #allocation7 [shape = 'u8[8192]{0}', space=vmem, size = 0x2000, scoped, tag = 'input window, operand 2, single buffered']
    #allocation8 [shape = 'u8[1024]{0}', space=vmem, size = 0x400, scoped, tag = 'input window, operand 4, single buffered']
    #allocation9 [shape = 's32[1]{0}', space=sflag, size = 0x4, scoped, tag = 'scoped memory for tpu_custom_call.1']
    #allocation10 [shape = 'u8[131072]{0}', space=vmem, size = 0x20000, scoped, tag = 'input window, operand 5, single buffered']
    #allocation11 [shape = 'u8[65536]{0}', space=vmem, size = 0x10000, scoped, tag = 'input window, operand 7, single buffered']
    #allocation12 [shape = 's32[1]{0}', space=sflag, size = 0x4, scoped, tag = 'scoped memory for tpu_custom_call.1']
    #allocation13 [shape = 'u8[32768]{0}', space=vmem, size = 0x8000, scoped, tag = 'output window, operand 0, single buffered']
    %14 = vsyncpa [#allocation3], 0
    %15 = vsyncpa [#allocation6], 0
    %16 = vsyncpa [#allocation9], 0
    %17 = vsyncpa [#allocation12], 0
    %18 = vsyncpa [#allocation4], 0
    loop: start=0, step=1, limit=4
    $region2: #{tpu_custom_call.1} parent=1 // loop_pre_header
      _
    $region3: #{tpu_custom_call.1} parent=1 // loop_header
      %s20 = sphi 0, %s24
      %p21 = scmp.ge.s32.totalorder %s20, 4
      %s27 = sphi 0, %s39
      %s28 = sphi 0, %s35
      %s29 = sphi 0, %s27
      %s30 = sphi 0, %s28
      %s31 = sphi 0, %s29
      %s32 = sphi 0, %s30
      %s42 = sphi 0, %s44
      %s45 = sphi 0, %s42
      %s46 = sphi 0, %s45
      %s62 = sphi 0, %s46
      %s66 = sphi 0, %s66
      %s68 = sphi 0, %s66
      %s69 = sphi 0, %s68
      %s83 = sphi 0, %s69
      %s87 = sphi 0, %s87
      %s89 = sphi 0, %s87
      %s90 = sphi 0, %s89
      %s104 = sphi 0, %s90
      %s108 = sphi 0, %s108
      %s110 = sphi 0, %s108
      %s111 = sphi 0, %s110
      %s125 = sphi 0, %s111
      %s129 = sphi 0, %s129
      %s131 = sphi 0, %s129
      %s132 = sphi 0, %s131
      %s146 = sphi 0, %s132
      %s150 = sphi 0, %s150
      %s152 = sphi 0, %s150
      %s153 = sphi 0, %s152
      %s167 = sphi 0, %s153
      %s171 = sphi 0, %s171
      %s173 = sphi 0, %s171
      %s174 = sphi 0, %s173
      %s188 = sphi 0, %s174
      %s192 = sphi 0, %s192
      %s194 = sphi 0, %s192
      %s195 = sphi 0, %s194
      %s209 = sphi 0, %s195
      %s213 = sphi 0, %s213
      %s215 = sphi 0, %s213
      %s216 = sphi 0, %s215
      %s230 = sphi 0, %s216
      %s236 = sphi 0, %s238
      %s239 = sphi 0, %s236
      %s240 = sphi 0, %s239
      %s256 = sphi 0, %s240
    $region4: #{tpu_custom_call.1} parent=1 // loop_header_branch
      %23 = sbr.rel (%p21) target = $region8
    $region5: #{tpu_custom_call.1} parent=1 // loop_body
      %s25 = ssub.s32 %s20, 1
      %s26 = ssub.s32 %s20, 2
      %s33 = sadd.s32 1, %s28
      %p34 = scmp.ge.s32.totalorder %s33, 2
      %s35 = scalar_select %p34, 0, %s33
      %s36 = sadd.s32 1, %s27
      %s37 = scalar_select %p34, %s36, %s27
      %p38 = scmp.ge.s32.totalorder %s37, 1
      %s39 = scalar_select %p38, 0, %s37
      %s40 = ssub.s32 %s27, %s39
      %p41 = scmp.eq.s32.totalorder %s40, 0
      %s43 = sadd.s32 %s42, 1
      %s44 = scalar_select %p41, %s42, %s43
      %p47 = pneg %p41
      %p48 = scmp.eq.s32.totalorder %s20, 1
      %p49 = por %p47, %p48
      %p50 = scmp.ne.s32.totalorder %s42, %s45
      %p51 = scmp.eq.s32.totalorder %s20, 0
      %p52 = por %p50, %p51
      %p53 = scmp.ne.s32.totalorder %s42, %s45
      %p54 = scmp.eq.s32.totalorder %s25, 1
      %p55 = por %p53, %p54
      %p56 = scmp.ne.s32.totalorder %s45, %s46
      %p57 = scmp.eq.s32.totalorder %s25, 0
      %p58 = por %p56, %p57
      %p59 = scmp.ne.s32.totalorder %s45, %s46
      %p60 = scmp.eq.s32.totalorder %s26, 1
      %p61 = por %p59, %p60
      %p63 = scmp.ne.s32.totalorder %s46, %s62
      %p64 = scmp.eq.s32.totalorder %s26, 0
      %p65 = por %p63, %p64
      %s67 = sadd.s32 %s66, 1
      %p70 = scmp.eq.s32.totalorder %s20, 1
      %p71 = scmp.ne.s32.totalorder %s66, %s68
      %p72 = scmp.eq.s32.totalorder %s20, 0
      %p73 = por %p71, %p72
      %p74 = scmp.ne.s32.totalorder %s66, %s68
      %p75 = scmp.eq.s32.totalorder %s25, 1
      %p76 = por %p74, %p75
      %p77 = scmp.ne.s32.totalorder %s68, %s69
      %p78 = scmp.eq.s32.totalorder %s25, 0
      %p79 = por %p77, %p78
      %p80 = scmp.ne.s32.totalorder %s68, %s69
      %p81 = scmp.eq.s32.totalorder %s26, 1
      %p82 = por %p80, %p81
      %p84 = scmp.ne.s32.totalorder %s69, %s83
      %p85 = scmp.eq.s32.totalorder %s26, 0
      %p86 = por %p84, %p85
      %s88 = sadd.s32 %s87, 1
      %p91 = scmp.eq.s32.totalorder %s20, 1
      %p92 = scmp.ne.s32.totalorder %s87, %s89
      %p93 = scmp.eq.s32.totalorder %s20, 0
      %p94 = por %p92, %p93
      %p95 = scmp.ne.s32.totalorder %s87, %s89
      %p96 = scmp.eq.s32.totalorder %s25, 1
      %p97 = por %p95, %p96
      %p98 = scmp.ne.s32.totalorder %s89, %s90
      %p99 = scmp.eq.s32.totalorder %s25, 0
      %p100 = por %p98, %p99
      %p101 = scmp.ne.s32.totalorder %s89, %s90
      %p102 = scmp.eq.s32.totalorder %s26, 1
      %p103 = por %p101, %p102
      %p105 = scmp.ne.s32.totalorder %s90, %s104
      %p106 = scmp.eq.s32.totalorder %s26, 0
      %p107 = por %p105, %p106
      %s109 = sadd.s32 %s108, 1
      %p112 = scmp.eq.s32.totalorder %s20, 1
      %p113 = scmp.ne.s32.totalorder %s108, %s110
      %p114 = scmp.eq.s32.totalorder %s20, 0
      %p115 = por %p113, %p114
      %p116 = scmp.ne.s32.totalorder %s108, %s110
      %p117 = scmp.eq.s32.totalorder %s25, 1
      %p118 = por %p116, %p117
      %p119 = scmp.ne.s32.totalorder %s110, %s111
      %p120 = scmp.eq.s32.totalorder %s25, 0
      %p121 = por %p119, %p120
      %p122 = scmp.ne.s32.totalorder %s110, %s111
      %p123 = scmp.eq.s32.totalorder %s26, 1
      %p124 = por %p122, %p123
      %p126 = scmp.ne.s32.totalorder %s111, %s125
      %p127 = scmp.eq.s32.totalorder %s26, 0
      %p128 = por %p126, %p127
      %s130 = sadd.s32 %s129, 1
      %p133 = scmp.eq.s32.totalorder %s20, 1
      %p134 = scmp.ne.s32.totalorder %s129, %s131
      %p135 = scmp.eq.s32.totalorder %s20, 0
      %p136 = por %p134, %p135
      %p137 = scmp.ne.s32.totalorder %s129, %s131
      %p138 = scmp.eq.s32.totalorder %s25, 1
      %p139 = por %p137, %p138
      %p140 = scmp.ne.s32.totalorder %s131, %s132
      %p141 = scmp.eq.s32.totalorder %s25, 0
      %p142 = por %p140, %p141
      %p143 = scmp.ne.s32.totalorder %s131, %s132
      %p144 = scmp.eq.s32.totalorder %s26, 1
      %p145 = por %p143, %p144
      %p147 = scmp.ne.s32.totalorder %s132, %s146
      %p148 = scmp.eq.s32.totalorder %s26, 0
      %p149 = por %p147, %p148
      %s151 = sadd.s32 %s150, 1
      %p154 = scmp.eq.s32.totalorder %s20, 1
      %p155 = scmp.ne.s32.totalorder %s150, %s152
      %p156 = scmp.eq.s32.totalorder %s20, 0
      %p157 = por %p155, %p156
      %p158 = scmp.ne.s32.totalorder %s150, %s152
      %p159 = scmp.eq.s32.totalorder %s25, 1
      %p160 = por %p158, %p159
      %p161 = scmp.ne.s32.totalorder %s152, %s153
      %p162 = scmp.eq.s32.totalorder %s25, 0
      %p163 = por %p161, %p162
      %p164 = scmp.ne.s32.totalorder %s152, %s153
      %p165 = scmp.eq.s32.totalorder %s26, 1
      %p166 = por %p164, %p165
      %p168 = scmp.ne.s32.totalorder %s153, %s167
      %p169 = scmp.eq.s32.totalorder %s26, 0
      %p170 = por %p168, %p169
      %s172 = sadd.s32 %s171, 1
      %p175 = scmp.eq.s32.totalorder %s20, 1
      %p176 = scmp.ne.s32.totalorder %s171, %s173
      %p177 = scmp.eq.s32.totalorder %s20, 0
      %p178 = por %p176, %p177
      %p179 = scmp.ne.s32.totalorder %s171, %s173
      %p180 = scmp.eq.s32.totalorder %s25, 1
      %p181 = por %p179, %p180
      %p182 = scmp.ne.s32.totalorder %s173, %s174
      %p183 = scmp.eq.s32.totalorder %s25, 0
      %p184 = por %p182, %p183
      %p185 = scmp.ne.s32.totalorder %s173, %s174
      %p186 = scmp.eq.s32.totalorder %s26, 1
      %p187 = por %p185, %p186
      %p189 = scmp.ne.s32.totalorder %s174, %s188
      %p190 = scmp.eq.s32.totalorder %s26, 0
      %p191 = por %p189, %p190
      %s193 = sadd.s32 %s192, 1
      %p196 = scmp.eq.s32.totalorder %s20, 1
      %p197 = scmp.ne.s32.totalorder %s192, %s194
      %p198 = scmp.eq.s32.totalorder %s20, 0
      %p199 = por %p197, %p198
      %p200 = scmp.ne.s32.totalorder %s192, %s194
      %p201 = scmp.eq.s32.totalorder %s25, 1
      %p202 = por %p200, %p201
      %p203 = scmp.ne.s32.totalorder %s194, %s195
      %p204 = scmp.eq.s32.totalorder %s25, 0
      %p205 = por %p203, %p204
      %p206 = scmp.ne.s32.totalorder %s194, %s195
      %p207 = scmp.eq.s32.totalorder %s26, 1
      %p208 = por %p206, %p207
      %p210 = scmp.ne.s32.totalorder %s195, %s209
      %p211 = scmp.eq.s32.totalorder %s26, 0
      %p212 = por %p210, %p211
      %s214 = sadd.s32 %s213, 1
      %p217 = scmp.eq.s32.totalorder %s20, 1
      %p218 = scmp.ne.s32.totalorder %s213, %s215
      %p219 = scmp.eq.s32.totalorder %s20, 0
      %p220 = por %p218, %p219
      %p221 = scmp.ne.s32.totalorder %s213, %s215
      %p222 = scmp.eq.s32.totalorder %s25, 1
      %p223 = por %p221, %p222
      %p224 = scmp.ne.s32.totalorder %s215, %s216
      %p225 = scmp.eq.s32.totalorder %s25, 0
      %p226 = por %p224, %p225
      %p227 = scmp.ne.s32.totalorder %s215, %s216
      %p228 = scmp.eq.s32.totalorder %s26, 1
      %p229 = por %p227, %p228
      %p231 = scmp.ne.s32.totalorder %s216, %s230
      %p232 = scmp.eq.s32.totalorder %s26, 0
      %p233 = por %p231, %p232
      %s234 = ssub.s32 %s27, %s39
      %p235 = scmp.eq.s32.totalorder %s234, 0
      %s237 = sadd.s32 %s236, 1
      %s238 = scalar_select %p235, %s236, %s237
      %p241 = pneg %p235
      %p242 = scmp.eq.s32.totalorder %s20, 1
      %p243 = por %p241, %p242
      %p244 = scmp.ne.s32.totalorder %s236, %s239
      %p245 = scmp.eq.s32.totalorder %s20, 0
      %p246 = por %p244, %p245
      %p247 = scmp.ne.s32.totalorder %s236, %s239
      %p248 = scmp.eq.s32.totalorder %s25, 1
      %p249 = por %p247, %p248
      %p250 = scmp.ne.s32.totalorder %s239, %s240
      %p251 = scmp.eq.s32.totalorder %s25, 0
      %p252 = por %p250, %p251
      %p253 = scmp.ne.s32.totalorder %s239, %s240
      %p254 = scmp.eq.s32.totalorder %s26, 1
      %p255 = por %p253, %p254
      %p257 = scmp.ne.s32.totalorder %s240, %s256
      %p258 = scmp.eq.s32.totalorder %s26, 0
      %p259 = por %p257, %p258
      %p260 = scmp.le.s32.totalorder 1, %s20
      %p261 = scmp.lt.s32.totalorder %s20, 3
      %p262 = pnand %p260, %p261
      %p263 = pneg %p262
      // Predicated region
      $region9: #{tpu_custom_call.1} parent=5 // pred_check
        _
      $region10: #{tpu_custom_call.1} parent=5 // pred_check_branch
        %265 = sbr.rel (%p262) target = $region12
      $region11: #{tpu_custom_call.1} parent=5 // pred_region
        %s266 = ssub.s32 %s20, 1
        // Predicated region
        $region13: #{tpu_custom_call.1} parent=11 // pred_check
          %p267 = pneg %p58
        $region14: #{tpu_custom_call.1} parent=11 // pred_check_branch
          %269 = sbr.rel (%p267) target = $region16
        $region15: #{tpu_custom_call.1} parent=11 // pred_region
          %s270 = smul.u32 8, %s29
          %s272 = ssub.s32 1024, 1024
          %273 = vsyncadd [#allocation3], %s272
          %s274 = smul.addr %s270, 128
          %s275 = scalar_lea.hbm %s0, %s274
          %s276 = sshll.u32 [#allocation2], 4
          %s277 = int_to_ptr.vmem [resolvable:$true] %s276
          %282 = dma.hbm_to_vmem [thread:$0]  %s275, 1024, %s277, [#allocation3], 128, 128, 8
        $region16: #{tpu_custom_call.1} parent=11 // pred_fallthru
          _
        // Predicated region
        $region17: #{tpu_custom_call.1} parent=11 // pred_check
          %p283 = pneg %p79
        $region18: #{tpu_custom_call.1} parent=11 // pred_check_branch
          %285 = sbr.rel (%p283) target = $region20
        $region19: #{tpu_custom_call.1} parent=11 // pred_region
          %s287 = ssub.s32 256, 256
          %288 = vsyncadd [#allocation6], %s287
          %s289 = sshll.u32 [#allocation5], 4
          %s290 = int_to_ptr.vmem [resolvable:$true] %s289
          %295 = dma.hbm_to_vmem [thread:$0]  %s1, 256, %s290, [#allocation6], 128, 128, 8
        $region20: #{tpu_custom_call.1} parent=11 // pred_fallthru
          _
        // Predicated region
        $region21: #{tpu_custom_call.1} parent=11 // pred_check
          %p296 = pneg %p100
        $region22: #{tpu_custom_call.1} parent=11 // pred_check_branch
          %298 = sbr.rel (%p296) target = $region24
        $region23: #{tpu_custom_call.1} parent=11 // pred_region
          %s300 = ssub.s32 256, 256
          %301 = vsyncadd [#allocation6], %s300
          %s302 = sshll.u32 [#allocation7], 4
          %s303 = int_to_ptr.vmem [resolvable:$true] %s302
          %308 = dma.hbm_to_vmem [thread:$0]  %s2, 256, %s303, [#allocation6], 128, 128, 8
        $region24: #{tpu_custom_call.1} parent=11 // pred_fallthru
          _
        // Predicated region
        $region25: #{tpu_custom_call.1} parent=11 // pred_check
          %p309 = pneg %p121
        $region26: #{tpu_custom_call.1} parent=11 // pred_check_branch
          %311 = sbr.rel (%p309) target = $region28
        $region27: #{tpu_custom_call.1} parent=11 // pred_region
          _
        $region28: #{tpu_custom_call.1} parent=11 // pred_fallthru
          _
        // Predicated region
        $region29: #{tpu_custom_call.1} parent=11 // pred_check
          %p312 = pneg %p142
        $region30: #{tpu_custom_call.1} parent=11 // pred_check_branch
          %314 = sbr.rel (%p312) target = $region32
        $region31: #{tpu_custom_call.1} parent=11 // pred_region
          %s316 = ssub.s32 32, 32
          %317 = vsyncadd [#allocation9], %s316
          %s318 = sshll.u32 [#allocation8], 4
          %s319 = int_to_ptr.vmem [resolvable:$true] %s318
          %324 = dma.hbm_to_vmem [thread:$0]  %s4, 32, %s319, [#allocation9], 16, 16, 1
        $region32: #{tpu_custom_call.1} parent=11 // pred_fallthru
          _
        // Predicated region
        $region33: #{tpu_custom_call.1} parent=11 // pred_check
          %p325 = pneg %p163
        $region34: #{tpu_custom_call.1} parent=11 // pred_check_branch
          %327 = sbr.rel (%p325) target = $region36
        $region35: #{tpu_custom_call.1} parent=11 // pred_region
          %s329 = ssub.s32 4096, 4096
          %330 = vsyncadd [#allocation9], %s329
          %s331 = sshll.u32 [#allocation10], 4
          %s332 = int_to_ptr.vmem [resolvable:$true] %s331
          %337 = dma.hbm_to_vmem [thread:$0]  %s5, 4096, %s332, [#allocation9], 128, 128, 8
        $region36: #{tpu_custom_call.1} parent=11 // pred_fallthru
          _
        // Predicated region
        $region37: #{tpu_custom_call.1} parent=11 // pred_check
          %p338 = pneg %p184
        $region38: #{tpu_custom_call.1} parent=11 // pred_check_branch
          %340 = sbr.rel (%p338) target = $region40
        $region39: #{tpu_custom_call.1} parent=11 // pred_region
          _
        $region40: #{tpu_custom_call.1} parent=11 // pred_fallthru
          _
        // Predicated region
        $region41: #{tpu_custom_call.1} parent=11 // pred_check
          %p341 = pneg %p205
        $region42: #{tpu_custom_call.1} parent=11 // pred_check_branch
          %343 = sbr.rel (%p341) target = $region44
        $region43: #{tpu_custom_call.1} parent=11 // pred_region
          %s345 = ssub.s32 2048, 2048
          %346 = vsyncadd [#allocation12], %s345
          %s347 = sshll.u32 [#allocation11], 4
          %s348 = int_to_ptr.vmem [resolvable:$true] %s347
          %353 = dma.hbm_to_vmem [thread:$0]  %s7, 2048, %s348, [#allocation12], 64, 64, 4
        $region44: #{tpu_custom_call.1} parent=11 // pred_fallthru
          _
        // Predicated region
        $region45: #{tpu_custom_call.1} parent=11 // pred_check
          %p354 = pneg %p226
        $region46: #{tpu_custom_call.1} parent=11 // pred_check_branch
          %356 = sbr.rel (%p354) target = $region48
        $region47: #{tpu_custom_call.1} parent=11 // pred_region
          _
        $region48: #{tpu_custom_call.1} parent=11 // pred_fallthru
          _
      $region12: #{tpu_custom_call.1} parent=5 // pred_fallthru
        _
      %p357 = scmp.lt.s32.totalorder %s20, 2
      // Predicated region
      $region49: #{tpu_custom_call.1} parent=5 // pred_check
        %p358 = pneg %p357
      $region50: #{tpu_custom_call.1} parent=5 // pred_check_branch
        %360 = sbr.rel (%p358) target = $region52
      $region51: #{tpu_custom_call.1} parent=5 // pred_region
        _
      $region52: #{tpu_custom_call.1} parent=5 // pred_fallthru
        _
      %p361 = scmp.le.s32.totalorder 1, %s20
      %p362 = scmp.lt.s32.totalorder %s20, 3
      %p363 = pnand %p361, %p362
      %p364 = pneg %p363
      // Predicated region
      $region53: #{tpu_custom_call.1} parent=5 // pred_check
        _
      $region54: #{tpu_custom_call.1} parent=5 // pred_check_branch
        %366 = sbr.rel (%p363) target = $region56
      $region55: #{tpu_custom_call.1} parent=5 // pred_region
        %s367 = ssub.s32 %s20, 1
        // Predicated region
        $region57: #{tpu_custom_call.1} parent=55 // pred_check
          %p368 = pneg %p58
        $region58: #{tpu_custom_call.1} parent=55 // pred_check_branch
          %370 = sbr.rel (%p368) target = $region60
        $region59: #{tpu_custom_call.1} parent=55 // pred_region
          %371 = dma.done [#allocation3], 1024
        $region60: #{tpu_custom_call.1} parent=55 // pred_fallthru
          _
        // Predicated region
        $region61: #{tpu_custom_call.1} parent=55 // pred_check
          %p372 = pneg %p79
        $region62: #{tpu_custom_call.1} parent=55 // pred_check_branch
          %374 = sbr.rel (%p372) target = $region64
        $region63: #{tpu_custom_call.1} parent=55 // pred_region
          %375 = dma.done [#allocation6], 256
        $region64: #{tpu_custom_call.1} parent=55 // pred_fallthru
          _
        // Predicated region
        $region65: #{tpu_custom_call.1} parent=55 // pred_check
          %p376 = pneg %p100
        $region66: #{tpu_custom_call.1} parent=55 // pred_check_branch
          %378 = sbr.rel (%p376) target = $region68
        $region67: #{tpu_custom_call.1} parent=55 // pred_region
          %379 = dma.done [#allocation6], 256
        $region68: #{tpu_custom_call.1} parent=55 // pred_fallthru
          _
        // Predicated region
        $region69: #{tpu_custom_call.1} parent=55 // pred_check
          %p380 = pneg %p142
        $region70: #{tpu_custom_call.1} parent=55 // pred_check_branch
          %382 = sbr.rel (%p380) target = $region72
        $region71: #{tpu_custom_call.1} parent=55 // pred_region
          %383 = dma.done [#allocation9], 32
        $region72: #{tpu_custom_call.1} parent=55 // pred_fallthru
          _
        // Predicated region
        $region73: #{tpu_custom_call.1} parent=55 // pred_check
          %p384 = pneg %p163
        $region74: #{tpu_custom_call.1} parent=55 // pred_check_branch
          %386 = sbr.rel (%p384) target = $region76
        $region75: #{tpu_custom_call.1} parent=55 // pred_region
          %387 = dma.done [#allocation9], 4096
        $region76: #{tpu_custom_call.1} parent=55 // pred_fallthru
          _
        // Predicated region
        $region77: #{tpu_custom_call.1} parent=55 // pred_check
          %p388 = pneg %p205
        $region78: #{tpu_custom_call.1} parent=55 // pred_check_branch
          %390 = sbr.rel (%p388) target = $region80
        $region79: #{tpu_custom_call.1} parent=55 // pred_region
          %391 = dma.done [#allocation12], 2048
        $region80: #{tpu_custom_call.1} parent=55 // pred_fallthru
          _
        %p392 = pneg %p58
        %p393 = pneg %p55
        %p394 = pneg %p79
        %p395 = pneg %p76
        %p396 = pneg %p100
        %p397 = pneg %p97
        %p398 = pneg %p121
        %p399 = pneg %p118
        %p400 = pneg %p142
        %p401 = pneg %p139
        %p402 = pneg %p163
        %p403 = pneg %p160
        %p404 = pneg %p184
        %p405 = pneg %p181
        %p406 = pneg %p205
        %p407 = pneg %p202
        %p408 = pneg %p226
        %p409 = pneg %p223
        %p410 = pneg %p252
        %p411 = pneg %p249
        %s412 = smul.u32 8, %s29
        %s413 = smul.u32 8, %s29
        %p415 = scmp.eq.s32.totalorder %s30, 0
        // Predicated region
        $region81: #{tpu_custom_call.1} parent=55 // pred_check
          %p416 = pneg %p415
        $region82: #{tpu_custom_call.1} parent=55 // pred_check_branch
          %418 = sbr.rel (%p416) target = $region84
        $region83: #{tpu_custom_call.1} parent=55 // pred_region
          %v419 = vld [vmem:[#allocation2] sm:$0xff]
          %v420 = vld [vmem:[#allocation2 + $0x8] sm:$0xff]
          %v421 = vld [vmem:[#allocation2 + $0x10] sm:$0xff]
          %v422 = vld [vmem:[#allocation2 + $0x18] sm:$0xff]
          %v423 = vld [vmem:[#allocation2 + $0x20] sm:$0xff]
          %v424 = vld [vmem:[#allocation2 + $0x28] sm:$0xff]
          %v425 = vld [vmem:[#allocation2 + $0x30] sm:$0xff]
          %v426 = vld [vmem:[#allocation2 + $0x38] sm:$0xff]
          %427 = vst [vmem:[#allocation13] sm:$0xff] %v419
          %428 = vst [vmem:[#allocation13 + $0x8] sm:$0xff] %v420
          %429 = vst [vmem:[#allocation13 + $0x10] sm:$0xff] %v421
          %430 = vst [vmem:[#allocation13 + $0x18] sm:$0xff] %v422
          %431 = vst [vmem:[#allocation13 + $0x20] sm:$0xff] %v423
          %432 = vst [vmem:[#allocation13 + $0x28] sm:$0xff] %v424
          %433 = vst [vmem:[#allocation13 + $0x30] sm:$0xff] %v425
          %434 = vst [vmem:[#allocation13 + $0x38] sm:$0xff] %v426
        $region84: #{tpu_custom_call.1} parent=55 // pred_fallthru
          _
        %v435 = vld [vmem:[#allocation13] sm:$0xff]
        %v436 = vld [vmem:[#allocation13 + $0x8] sm:$0xff]
        %v437 = vld [vmem:[#allocation13 + $0x10] sm:$0xff]
        %v438 = vld [vmem:[#allocation13 + $0x18] sm:$0xff]
        %v439 = vld [vmem:[#allocation13 + $0x20] sm:$0xff]
        %v440 = vld [vmem:[#allocation13 + $0x28] sm:$0xff]
        %v441 = vld [vmem:[#allocation13 + $0x30] sm:$0xff]
        %v442 = vld [vmem:[#allocation13 + $0x38] sm:$0xff]
        %s443 = smul.u32 %s30, 8
        %s444 = scalar_lea.vmem [#allocation5], %s443
        %v445 = vld [vmem:[%s444] sm:$0xff]
        %s446 = scalar_lea.vmem [#allocation7], %s443
        %v447 = vld [vmem:[%s446] sm:$0xff]
        %s448 = scalar_lea.vmem %s3, %s30
        %v449 = vld [vmem:[%s448] sm:$0x1]
        %s450 = scalar_lea.vmem [#allocation8], %s30
        %v451 = vld [vmem:[%s450] sm:$0x1]
        %s452 = smul.u32 %s30, 32
        %s453 = smul.addr %s452, 4
        %s454 = scalar_lea.vmem [#allocation10], %s453
        %v455 = vld [vmem:[%s454] sm:$0xff]
        %v456 = vld [vmem:[%s454 + $0x8] sm:$0xff]
        %v457 = vld [vmem:[%s454 + $0x10] sm:$0xff]
        %v458 = vld [vmem:[%s454 + $0x18] sm:$0xff]
        %v459 = vld [vmem:[%s454 + $0x20] sm:$0xff]
        %v460 = vld [vmem:[%s454 + $0x28] sm:$0xff]
        %v461 = vld [vmem:[%s454 + $0x30] sm:$0xff]
        %v462 = vld [vmem:[%s454 + $0x38] sm:$0xff]
        %v463 = vld [vmem:[%s454 + $0x40] sm:$0xff]
        %v464 = vld [vmem:[%s454 + $0x48] sm:$0xff]
        %v465 = vld [vmem:[%s454 + $0x50] sm:$0xff]
        %v466 = vld [vmem:[%s454 + $0x58] sm:$0xff]
        %v467 = vld [vmem:[%s454 + $0x60] sm:$0xff]
        %v468 = vld [vmem:[%s454 + $0x68] sm:$0xff]
        %v469 = vld [vmem:[%s454 + $0x70] sm:$0xff]
        %v470 = vld [vmem:[%s454 + $0x78] sm:$0xff]
        %s471 = smul.u32 %s30, 2
        %s472 = scalar_lea.vmem %s6, %s471
        %v473 = vld [vmem:[%s472] sm:$0x3]
        %s474 = smul.u32 %s30, 16
        %s475 = smul.addr %s474, 4
        %s476 = scalar_lea.vmem [#allocation11], %s475
        %v477 = vld [vmem:[%s476] sm:$0xf]
        %v478 = vld [vmem:[%s476 + $0x4] sm:$0xf]
        %v479 = vld [vmem:[%s476 + $0x8] sm:$0xf]
        %v480 = vld [vmem:[%s476 + $0xc] sm:$0xf]
        %v481 = vld [vmem:[%s476 + $0x10] sm:$0xf]
        %v482 = vld [vmem:[%s476 + $0x14] sm:$0xf]
        %v483 = vld [vmem:[%s476 + $0x18] sm:$0xf]
        %v484 = vld [vmem:[%s476 + $0x1c] sm:$0xf]
        %v485 = vld [vmem:[%s476 + $0x20] sm:$0xf]
        %v486 = vld [vmem:[%s476 + $0x24] sm:$0xf]
        %v487 = vld [vmem:[%s476 + $0x28] sm:$0xf]
        %v488 = vld [vmem:[%s476 + $0x2c] sm:$0xf]
        %v489 = vld [vmem:[%s476 + $0x30] sm:$0xf]
        %v490 = vld [vmem:[%s476 + $0x34] sm:$0xf]
        %v491 = vld [vmem:[%s476 + $0x38] sm:$0xf]
        %v492 = vld [vmem:[%s476 + $0x3c] sm:$0xf]
        %s493 = scalar_lea.vmem %s8, %s30
        %v494 = vld [vmem:[%s493] sm:$0x1]
        %495 = vadd.xlane.f32.xlu0 %v435
        %v496 = vpop.xlane.xlu0 %495
        %497 = vadd.xlane.f32.xlu0 %v436
        %v498 = vpop.xlane.xlu0 %497
        %499 = vadd.xlane.f32.xlu0 %v437
        %v500 = vpop.xlane.xlu0 %499
        %501 = vadd.xlane.f32.xlu0 %v438
        %v502 = vpop.xlane.xlu0 %501
        %503 = vadd.xlane.f32.xlu0 %v439
        %v504 = vpop.xlane.xlu0 %503
        %505 = vadd.xlane.f32.xlu0 %v440
        %v506 = vpop.xlane.xlu0 %505
        %507 = vadd.xlane.f32.xlu0 %v441
        %v508 = vpop.xlane.xlu0 %507
        %509 = vadd.xlane.f32.xlu0 %v442
        %v510 = vpop.xlane.xlu0 %509
        %v511 = vrot.slane %v496, 4
        %v512 = vadd.f32 %v496, %v511
        %v513 = vrot.slane %v512, 2
        %v514 = vadd.f32 %v512, %v513
        %v515 = vrot.slane %v514, 1
        %v516 = vadd.f32 %v514, %v515
        %v517 = vrot.slane %v498, 4
        %v518 = vadd.f32 %v498, %v517
        %v519 = vrot.slane %v518, 2
        %v520 = vadd.f32 %v518, %v519
        %v521 = vrot.slane %v520, 1
        %v522 = vadd.f32 %v520, %v521
        %v523 = vrot.slane %v500, 4
        %v524 = vadd.f32 %v500, %v523
        %v525 = vrot.slane %v524, 2
        %v526 = vadd.f32 %v524, %v525
        %v527 = vrot.slane %v526, 1
        %v528 = vadd.f32 %v526, %v527
        %v529 = vrot.slane %v502, 4
        %v530 = vadd.f32 %v502, %v529
        %v531 = vrot.slane %v530, 2
        %v532 = vadd.f32 %v530, %v531
        %v533 = vrot.slane %v532, 1
        %v534 = vadd.f32 %v532, %v533
        %v535 = vrot.slane %v504, 4
        %v536 = vadd.f32 %v504, %v535
        %v537 = vrot.slane %v536, 2
        %v538 = vadd.f32 %v536, %v537
        %v539 = vrot.slane %v538, 1
        %v540 = vadd.f32 %v538, %v539
        %v541 = vrot.slane %v506, 4
        %v542 = vadd.f32 %v506, %v541
        %v543 = vrot.slane %v542, 2
        %v544 = vadd.f32 %v542, %v543
        %v545 = vrot.slane %v544, 1
        %v546 = vadd.f32 %v544, %v545
        %v547 = vrot.slane %v508, 4
        %v548 = vadd.f32 %v508, %v547
        %v549 = vrot.slane %v548, 2
        %v550 = vadd.f32 %v548, %v549
        %v551 = vrot.slane %v550, 1
        %v552 = vadd.f32 %v550, %v551
        %v553 = vrot.slane %v510, 4
        %v554 = vadd.f32 %v510, %v553
        %v555 = vrot.slane %v554, 2
        %v556 = vadd.f32 %v554, %v555
        %v557 = vrot.slane %v556, 1
        %v558 = vadd.f32 %v556, %v557
        %v559 = vmul.f32 %v516, 0.0009765625
        %v560 = vmul.f32 %v522, 0.0009765625
        %v561 = vmul.f32 %v528, 0.0009765625
        %v562 = vmul.f32 %v534, 0.0009765625
        %v563 = vmul.f32 %v540, 0.0009765625
        %v564 = vmul.f32 %v546, 0.0009765625
        %v565 = vmul.f32 %v552, 0.0009765625
        %v566 = vmul.f32 %v558, 0.0009765625
        %v567 = vsub.f32 %v435, %v559
        %v568 = vsub.f32 %v436, %v560
        %v569 = vsub.f32 %v437, %v561
        %v570 = vsub.f32 %v438, %v562
        %v571 = vsub.f32 %v439, %v563
        %v572 = vsub.f32 %v440, %v564
        %v573 = vsub.f32 %v441, %v565
        %v574 = vsub.f32 %v442, %v566
        %v575 = vmul.f32 %v567, %v567
        %v576 = vmul.f32 %v568, %v568
        %v577 = vmul.f32 %v569, %v569
        %v578 = vmul.f32 %v570, %v570
        %v579 = vmul.f32 %v571, %v571
        %v580 = vmul.f32 %v572, %v572
        %v581 = vmul.f32 %v573, %v573
        %v582 = vmul.f32 %v574, %v574
        %583 = vadd.xlane.f32.xlu0 %v575
        %v584 = vpop.xlane.xlu0 %583
        %585 = vadd.xlane.f32.xlu0 %v576
        %v586 = vpop.xlane.xlu0 %585
        %587 = vadd.xlane.f32.xlu0 %v577
        %v588 = vpop.xlane.xlu0 %587
        %589 = vadd.xlane.f32.xlu0 %v578
        %v590 = vpop.xlane.xlu0 %589
        %591 = vadd.xlane.f32.xlu0 %v579
        %v592 = vpop.xlane.xlu0 %591
        %593 = vadd.xlane.f32.xlu0 %v580
        %v594 = vpop.xlane.xlu0 %593
        %595 = vadd.xlane.f32.xlu0 %v581
        %v596 = vpop.xlane.xlu0 %595
        %597 = vadd.xlane.f32.xlu0 %v582
        %v598 = vpop.xlane.xlu0 %597
        %v599 = vrot.slane %v584, 4
        %v600 = vadd.f32 %v584, %v599
        %v601 = vrot.slane %v600, 2
        %v602 = vadd.f32 %v600, %v601
        %v603 = vrot.slane %v602, 1
        %v604 = vadd.f32 %v602, %v603
        %v605 = vrot.slane %v586, 4
        %v606 = vadd.f32 %v586, %v605
        %v607 = vrot.slane %v606, 2
        %v608 = vadd.f32 %v606, %v607
        %v609 = vrot.slane %v608, 1
        %v610 = vadd.f32 %v608, %v609
        %v611 = vrot.slane %v588, 4
        %v612 = vadd.f32 %v588, %v611
        %v613 = vrot.slane %v612, 2
        %v614 = vadd.f32 %v612, %v613
        %v615 = vrot.slane %v614, 1
        %v616 = vadd.f32 %v614, %v615
        %v617 = vrot.slane %v590, 4
        %v618 = vadd.f32 %v590, %v617
        %v619 = vrot.slane %v618, 2
        %v620 = vadd.f32 %v618, %v619
        %v621 = vrot.slane %v620, 1
        %v622 = vadd.f32 %v620, %v621
        %v623 = vrot.slane %v592, 4
        %v624 = vadd.f32 %v592, %v623
        %v625 = vrot.slane %v624, 2
        %v626 = vadd.f32 %v624, %v625
        %v627 = vrot.slane %v626, 1
        %v628 = vadd.f32 %v626, %v627
        %v629 = vrot.slane %v594, 4
        %v630 = vadd.f32 %v594, %v629
        %v631 = vrot.slane %v630, 2
        %v632 = vadd.f32 %v630, %v631
        %v633 = vrot.slane %v632, 1
        %v634 = vadd.f32 %v632, %v633
        %v635 = vrot.slane %v596, 4
        %v636 = vadd.f32 %v596, %v635
        %v637 = vrot.slane %v636, 2
        %v638 = vadd.f32 %v636, %v637
        %v639 = vrot.slane %v638, 1
        %v640 = vadd.f32 %v638, %v639
        %v641 = vrot.slane %v598, 4
        %v642 = vadd.f32 %v598, %v641
        %v643 = vrot.slane %v642, 2
        %v644 = vadd.f32 %v642, %v643
        %v645 = vrot.slane %v644, 1
        %v646 = vadd.f32 %v644, %v645
        %v647 = vmul.f32 %v604, 0.0009765625
        %v648 = vmul.f32 %v610, 0.0009765625
        %v649 = vmul.f32 %v616, 0.0009765625
        %v650 = vmul.f32 %v622, 0.0009765625
        %v651 = vmul.f32 %v628, 0.0009765625
        %v652 = vmul.f32 %v634, 0.0009765625
        %v653 = vmul.f32 %v640, 0.0009765625
        %v654 = vmul.f32 %v646, 0.0009765625
        %v655 = vadd.f32 %v647, 1e-05
        %v656 = vadd.f32 %v648, 1e-05
        %v657 = vadd.f32 %v649, 1e-05
        %v658 = vadd.f32 %v650, 1e-05
        %v659 = vadd.f32 %v651, 1e-05
        %v660 = vadd.f32 %v652, 1e-05
        %v661 = vadd.f32 %v653, 1e-05
        %v662 = vadd.f32 %v654, 1e-05
        %v663 = vrsqrt.pop %v655
        %v664 = vrsqrt.pop %v656
        %v665 = vrsqrt.pop %v657
        %v666 = vrsqrt.pop %v658
        %v667 = vrsqrt.pop %v659
        %v668 = vrsqrt.pop %v660
        %v669 = vrsqrt.pop %v661
        %v670 = vrsqrt.pop %v662
        %v671 = vmul.f32 %v567, %v663
        %v672 = vmul.f32 %v568, %v664
        %v673 = vmul.f32 %v569, %v665
        %v674 = vmul.f32 %v570, %v666
        %v675 = vmul.f32 %v571, %v667
        %v676 = vmul.f32 %v572, %v668
        %v677 = vmul.f32 %v573, %v669
        %v678 = vmul.f32 %v574, %v670
        %v679 = vmul.f32 %v671, %v445
        %v680 = vmul.f32 %v672, %v445
        %v681 = vmul.f32 %v673, %v445
        %v682 = vmul.f32 %v674, %v445
        %v683 = vmul.f32 %v675, %v445
        %v684 = vmul.f32 %v676, %v445
        %v685 = vmul.f32 %v677, %v445
        %v686 = vmul.f32 %v678, %v445
        %v687 = vadd.f32 %v679, %v447
        %v688 = vadd.f32 %v680, %v447
        %v689 = vadd.f32 %v681, %v447
        %v690 = vadd.f32 %v682, %v447
        %v691 = vadd.f32 %v683, %v447
        %v692 = vadd.f32 %v684, %v447
        %v693 = vadd.f32 %v685, %v447
        %v694 = vadd.f32 %v686, %v447
        %v695 = vadd.f32 %v687, %v435
        %v696 = vadd.f32 %v688, %v436
        %v697 = vadd.f32 %v689, %v437
        %v698 = vadd.f32 %v690, %v438
        %v699 = vadd.f32 %v691, %v439
        %v700 = vadd.f32 %v692, %v440
        %v701 = vadd.f32 %v693, %v441
        %v702 = vadd.f32 %v694, %v442
        %703 = vadd.xlane.f32.xlu0 %v695
        %v704 = vpop.xlane.xlu0 %703
        %705 = vadd.xlane.f32.xlu0 %v696
        %v706 = vpop.xlane.xlu0 %705
        %707 = vadd.xlane.f32.xlu0 %v697
        %v708 = vpop.xlane.xlu0 %707
        %709 = vadd.xlane.f32.xlu0 %v698
        %v710 = vpop.xlane.xlu0 %709
        %711 = vadd.xlane.f32.xlu0 %v699
        %v712 = vpop.xlane.xlu0 %711
        %713 = vadd.xlane.f32.xlu0 %v700
        %v714 = vpop.xlane.xlu0 %713
        %715 = vadd.xlane.f32.xlu0 %v701
        %v716 = vpop.xlane.xlu0 %715
        %717 = vadd.xlane.f32.xlu0 %v702
        %v718 = vpop.xlane.xlu0 %717
        %v719 = vmul.f32 %v704, 0.0078125
        %v720 = vmul.f32 %v706, 0.0078125
        %v721 = vmul.f32 %v708, 0.0078125
        %v722 = vmul.f32 %v710, 0.0078125
        %v723 = vmul.f32 %v712, 0.0078125
        %v724 = vmul.f32 %v714, 0.0078125
        %v725 = vmul.f32 %v716, 0.0078125
        %v726 = vmul.f32 %v718, 0.0078125
        %v727 = vsub.f32 %v695, %v719
        %v728 = vsub.f32 %v696, %v720
        %v729 = vsub.f32 %v697, %v721
        %v730 = vsub.f32 %v698, %v722
        %v731 = vsub.f32 %v699, %v723
        %v732 = vsub.f32 %v700, %v724
        %v733 = vsub.f32 %v701, %v725
        %v734 = vsub.f32 %v702, %v726
        %v735 = vmul.f32 %v727, %v727
        %v736 = vmul.f32 %v728, %v728
        %v737 = vmul.f32 %v729, %v729
        %v738 = vmul.f32 %v730, %v730
        %v739 = vmul.f32 %v731, %v731
        %v740 = vmul.f32 %v732, %v732
        %v741 = vmul.f32 %v733, %v733
        %v742 = vmul.f32 %v734, %v734
        %743 = vadd.xlane.f32.xlu0 %v735
        %v744 = vpop.xlane.xlu0 %743
        %745 = vadd.xlane.f32.xlu0 %v736
        %v746 = vpop.xlane.xlu0 %745
        %747 = vadd.xlane.f32.xlu0 %v737
        %v748 = vpop.xlane.xlu0 %747
        %749 = vadd.xlane.f32.xlu0 %v738
        %v750 = vpop.xlane.xlu0 %749
        %751 = vadd.xlane.f32.xlu0 %v739
        %v752 = vpop.xlane.xlu0 %751
        %753 = vadd.xlane.f32.xlu0 %v740
        %v754 = vpop.xlane.xlu0 %753
        %755 = vadd.xlane.f32.xlu0 %v741
        %v756 = vpop.xlane.xlu0 %755
        %757 = vadd.xlane.f32.xlu0 %v742
        %v758 = vpop.xlane.xlu0 %757
        %v759 = vmul.f32 %v744, 0.0078125
        %v760 = vmul.f32 %v746, 0.0078125
        %v761 = vmul.f32 %v748, 0.0078125
        %v762 = vmul.f32 %v750, 0.0078125
        %v763 = vmul.f32 %v752, 0.0078125
        %v764 = vmul.f32 %v754, 0.0078125
        %v765 = vmul.f32 %v756, 0.0078125
        %v766 = vmul.f32 %v758, 0.0078125
        %v767 = vadd.f32 %v759, 1e-05
        %v768 = vadd.f32 %v760, 1e-05
        %v769 = vadd.f32 %v761, 1e-05
        %v770 = vadd.f32 %v762, 1e-05
        %v771 = vadd.f32 %v763, 1e-05
        %v772 = vadd.f32 %v764, 1e-05
        %v773 = vadd.f32 %v765, 1e-05
        %v774 = vadd.f32 %v766, 1e-05
        %v775 = vrsqrt.pop %v767
        %v776 = vrsqrt.pop %v768
        %v777 = vrsqrt.pop %v769
        %v778 = vrsqrt.pop %v770
        %v779 = vrsqrt.pop %v771
        %v780 = vrsqrt.pop %v772
        %v781 = vrsqrt.pop %v773
        %v782 = vrsqrt.pop %v774
        %v783 = vmul.f32 %v727, %v775
        %v784 = vmul.f32 %v728, %v776
        %v785 = vmul.f32 %v729, %v777
        %v786 = vmul.f32 %v730, %v778
        %v787 = vmul.f32 %v731, %v779
        %v788 = vmul.f32 %v732, %v780
        %v789 = vmul.f32 %v733, %v781
        %v790 = vmul.f32 %v734, %v782
        %v792 = vlaneseq
        %v793 = vshrl.u32 %v792, 7
        %v794 = vsub.s32 0, %v793
        %v795 = vrot.slane %v449, %v794
        %v797 = vmul.f32 %v783, %v795
        %v798 = vmul.f32 %v784, %v795
        %v799 = vmul.f32 %v785, %v795
        %v800 = vmul.f32 %v786, %v795
        %v801 = vmul.f32 %v787, %v795
        %v802 = vmul.f32 %v788, %v795
        %v803 = vmul.f32 %v789, %v795
        %v804 = vmul.f32 %v790, %v795
        %v806 = vlaneseq
        %v807 = vshrl.u32 %v806, 7
        %v808 = vsub.s32 0, %v807
        %v809 = vrot.slane %v451, %v808
        %v811 = vadd.f32 %v797, %v809
        %v812 = vadd.f32 %v798, %v809
        %v813 = vadd.f32 %v799, %v809
        %v814 = vadd.f32 %v800, %v809
        %v815 = vadd.f32 %v801, %v809
        %v816 = vadd.f32 %v802, %v809
        %v817 = vadd.f32 %v803, %v809
        %v818 = vadd.f32 %v804, %v809
        %v819 = vpack.c.bf16 %v812, %v811
        %v820 = vpack.c.bf16 %v814, %v813
        %v821 = vpack.c.bf16 %v816, %v815
        %v822 = vpack.c.bf16 %v818, %v817
        %v824 = vlaneseq
        %v825 = vshrl.u32 %v824, 7
        %v826 = vsub.s32 0, %v825
        %v827 = vrot.slane %v473, %v826
        %v828 = vlaneseq
        %v829 = vshrl.u32 %v828, 7
        %v830 = vsub.s32 1, %v829
        %v831 = vrot.slane %v473, %v830
        %v850 = vunpack.c.l.b16 %v455
        %v851 = vunpack.c.h.b16 %v455
        %v852 = vunpack.c.l.b16 %v456
        %v853 = vunpack.c.h.b16 %v456
        %v854 = vunpack.c.l.b16 %v457
        %v855 = vunpack.c.h.b16 %v457
        %v856 = vunpack.c.l.b16 %v458
        %v857 = vunpack.c.h.b16 %v458
        %v858 = vunpack.c.l.b16 %v459
        %v859 = vunpack.c.h.b16 %v459
        %v860 = vunpack.c.l.b16 %v460
        %v861 = vunpack.c.h.b16 %v460
        %v862 = vunpack.c.l.b16 %v461
        %v863 = vunpack.c.h.b16 %v461
        %v864 = vunpack.c.l.b16 %v462
        %v865 = vunpack.c.h.b16 %v462
        %v866 = vunpack.c.l.b16 %v463
        %v867 = vunpack.c.h.b16 %v463
        %v868 = vunpack.c.l.b16 %v464
        %v869 = vunpack.c.h.b16 %v464
        %v870 = vunpack.c.l.b16 %v465
        %v871 = vunpack.c.h.b16 %v465
        %v872 = vunpack.c.l.b16 %v466
        %v873 = vunpack.c.h.b16 %v466
        %v874 = vunpack.c.l.b16 %v467
        %v875 = vunpack.c.h.b16 %v467
        %v876 = vunpack.c.l.b16 %v468
        %v877 = vunpack.c.h.b16 %v468
        %v878 = vunpack.c.l.b16 %v469
        %v879 = vunpack.c.h.b16 %v469
        %v880 = vunpack.c.l.b16 %v470
        %v881 = vunpack.c.h.b16 %v470
        %v882 = vpack.c.b16 %v852, %v850
        %v883 = vpack.c.b16 %v853, %v851
        %v884 = vpack.c.b16 %v856, %v854
        %v885 = vpack.c.b16 %v857, %v855
        %v886 = vpack.c.b16 %v860, %v858
        %v887 = vpack.c.b16 %v861, %v859
        %v888 = vpack.c.b16 %v864, %v862
        %v889 = vpack.c.b16 %v865, %v863
        %v890 = vpack.c.b16 %v868, %v866
        %v891 = vpack.c.b16 %v869, %v867
        %v892 = vpack.c.b16 %v872, %v870
        %v893 = vpack.c.b16 %v873, %v871
        %v894 = vpack.c.b16 %v876, %v874
        %v895 = vpack.c.b16 %v877, %v875
        %v896 = vpack.c.b16 %v880, %v878
        %v897 = vpack.c.b16 %v881, %v879
        %914 = vmatprep.subr.bf16.mxu0 %v897
        %915 = vmatpush1.bf16.msra.mxu0 %v896
        %916 = vmatprep.subr.bf16.mxu0 %v895
        %917 = vmatpush1.bf16.msra.mxu0 %v894
        %918 = vmatprep.subr.bf16.mxu0 %v893
        %919 = vmatpush1.bf16.msra.mxu0 %v892
        %920 = vmatprep.subr.bf16.mxu0 %v891
        %921 = vmatpush1.bf16.msra.mxu0 %v890
        %922 = vmatprep.subr.bf16.mxu0 %v889
        %923 = vmatpush1.bf16.msra.mxu0 %v888
        %924 = vmatprep.subr.bf16.mxu0 %v887
        %925 = vmatpush1.bf16.msra.mxu0 %v886
        %926 = vmatprep.subr.bf16.mxu0 %v885
        %927 = vmatpush1.bf16.msra.mxu0 %v884
        %928 = vmatprep.subr.bf16.mxu0 %v883
        %929 = vmatpush1.bf16.msra.mxu0 %v882
        %930 = vmatprep.subr.bf16.mxu0 0
        %931 = vmatpush2.bf16.msra.mxu0 0
        %932 = vmatprep.subr.bf16.mxu0 0
        %933 = vmatpush2.bf16.msra.mxu0 0
        %934 = vmatprep.subr.bf16.mxu0 0
        %935 = vmatpush2.bf16.msra.mxu0 0
        %936 = vmatprep.subr.bf16.mxu0 0
        %937 = vmatpush2.bf16.msra.mxu0 0
        %938 = vmatprep.subr.bf16.mxu0 0
        %939 = vmatpush2.bf16.msra.mxu0 0
        %940 = vmatprep.subr.bf16.mxu0 0
        %941 = vmatpush2.bf16.msra.mxu0 0
        %942 = vmatprep.subr.bf16.mxu0 0
        %943 = vmatpush2.bf16.msra.mxu0 0
        %944 = vmatprep.subr.bf16.mxu0 0
        %945 = vmatpush2.bf16.msra.mxu0 0
        %946 = vmatprep.mubr.bf16.mxu0 0
        %947 = vmatmul.mubr.bf16.gmra.mxu0 %v819
        %v948 = vpop.f32.mrf.mxu0
        %v949 = vadd.f32 %v827, %v948
        %v950 = vpop.f32.mrf.mxu0
        %v951 = vadd.f32 %v831, %v950
        %v952 = vpop.f32.mrf.mxu0
        %v953 = vadd.f32 %v827, %v952
        %v954 = vpop.f32.mrf.mxu0
        %v955 = vadd.f32 %v831, %v954
        %956 = vmatprep.mubr.bf16.mxu0 0
        %957 = vmatmul.mubr.bf16.gmra.mxu0 %v820
        %v958 = vpop.f32.mrf.mxu0
        %v959 = vadd.f32 %v827, %v958
        %v960 = vpop.f32.mrf.mxu0
        %v961 = vadd.f32 %v831, %v960
        %v962 = vpop.f32.mrf.mxu0
        %v963 = vadd.f32 %v827, %v962
        %v964 = vpop.f32.mrf.mxu0
        %v965 = vadd.f32 %v831, %v964
        %966 = vmatprep.mubr.bf16.mxu0 0
        %967 = vmatmul.mubr.bf16.gmra.mxu0 %v821
        %v968 = vpop.f32.mrf.mxu0
        %v969 = vadd.f32 %v827, %v968
        %v970 = vpop.f32.mrf.mxu0
        %v971 = vadd.f32 %v831, %v970
        %v972 = vpop.f32.mrf.mxu0
        %v973 = vadd.f32 %v827, %v972
        %v974 = vpop.f32.mrf.mxu0
        %v975 = vadd.f32 %v831, %v974
        %976 = vmatprep.mubr.bf16.mxu0 0
        %977 = vmatmul.mubr.bf16.gmra.mxu0 %v822
        %v978 = vpop.f32.mrf.mxu0
        %v979 = vadd.f32 %v827, %v978
        %v980 = vpop.f32.mrf.mxu0
        %v981 = vadd.f32 %v831, %v980
        %v982 = vpop.f32.mrf.mxu0
        %v983 = vadd.f32 %v827, %v982
        %v984 = vpop.f32.mrf.mxu0
        %v985 = vadd.f32 %v831, %v984
        %986 = vdwg.mxu0
        %v987 = vxor.u32 %v949, 2147483648
        %v988 = vxor.u32 %v953, 2147483648
        %v989 = vxor.u32 %v959, 2147483648
        %v990 = vxor.u32 %v963, 2147483648
        %v991 = vxor.u32 %v969, 2147483648
        %v992 = vxor.u32 %v973, 2147483648
        %v993 = vxor.u32 %v979, 2147483648
        %v994 = vxor.u32 %v983, 2147483648
        %v995 = vmul.f32 %v987, 1.442695
        %v996 = vpow.pop %v995
        %v997 = vmul.f32 %v988, 1.442695
        %v998 = vpow.pop %v997
        %v999 = vmul.f32 %v989, 1.442695
        %v1000 = vpow.pop %v999
        %v1001 = vmul.f32 %v990, 1.442695
        %v1002 = vpow.pop %v1001
        %v1003 = vmul.f32 %v991, 1.442695
        %v1004 = vpow.pop %v1003
        %v1005 = vmul.f32 %v992, 1.442695
        %v1006 = vpow.pop %v1005
        %v1007 = vmul.f32 %v993, 1.442695
        %v1008 = vpow.pop %v1007
        %v1009 = vmul.f32 %v994, 1.442695
        %v1010 = vpow.pop %v1009
        %v1011 = vadd.f32 %v996, 1.0
        %v1012 = vadd.f32 %v998, 1.0
        %v1013 = vadd.f32 %v1000, 1.0
        %v1014 = vadd.f32 %v1002, 1.0
        %v1015 = vadd.f32 %v1004, 1.0
        %v1016 = vadd.f32 %v1006, 1.0
        %v1017 = vadd.f32 %v1008, 1.0
        %v1018 = vadd.f32 %v1010, 1.0
        %v1019 = vrcp.pop %v1011
        %v1020 = vmul.f32 1.0, %v1019
        %v1021 = vrcp.pop %v1012
        %v1022 = vmul.f32 1.0, %v1021
        %v1023 = vrcp.pop %v1013
        %v1024 = vmul.f32 1.0, %v1023
        %v1025 = vrcp.pop %v1014
        %v1026 = vmul.f32 1.0, %v1025
        %v1027 = vrcp.pop %v1015
        %v1028 = vmul.f32 1.0, %v1027
        %v1029 = vrcp.pop %v1016
        %v1030 = vmul.f32 1.0, %v1029
        %v1031 = vrcp.pop %v1017
        %v1032 = vmul.f32 1.0, %v1031
        %v1033 = vrcp.pop %v1018
        %v1034 = vmul.f32 1.0, %v1033
        %v1035 = vmul.f32 %v949, %v1020
        %v1036 = vmul.f32 %v953, %v1022
        %v1037 = vmul.f32 %v959, %v1024
        %v1038 = vmul.f32 %v963, %v1026
        %v1039 = vmul.f32 %v969, %v1028
        %v1040 = vmul.f32 %v973, %v1030
        %v1041 = vmul.f32 %v979, %v1032
        %v1042 = vmul.f32 %v983, %v1034
        %v1043 = vmul.f32 %v1035, %v951
        %v1044 = vmul.f32 %v1036, %v955
        %v1045 = vmul.f32 %v1037, %v961
        %v1046 = vmul.f32 %v1038, %v965
        %v1047 = vmul.f32 %v1039, %v971
        %v1048 = vmul.f32 %v1040, %v975
        %v1049 = vmul.f32 %v1041, %v981
        %v1050 = vmul.f32 %v1042, %v985
        %v1051 = vpack.c.bf16 %v1044, %v1043
        %v1052 = vpack.c.bf16 %v1046, %v1045
        %v1053 = vpack.c.bf16 %v1048, %v1047
        %v1054 = vpack.c.bf16 %v1050, %v1049
        %v1056 = vlaneseq
        %v1057 = vshrl.u32 %v1056, 7
        %v1058 = vsub.s32 0, %v1057
        %v1059 = vrot.slane %v494, %v1058
        %v1077 = vunpack.c.l.b16 %v477
        %v1078 = vunpack.c.l.b16 %v478
        %v1079 = vunpack.c.l.b16 %v479
        %v1080 = vunpack.c.l.b16 %v480
        %v1081 = vunpack.c.l.b16 %v481
        %v1082 = vunpack.c.l.b16 %v482
        %v1083 = vunpack.c.l.b16 %v483
        %v1084 = vunpack.c.l.b16 %v484
        %v1085 = vunpack.c.l.b16 %v485
        %v1086 = vunpack.c.l.b16 %v486
        %v1087 = vunpack.c.l.b16 %v487
        %v1088 = vunpack.c.l.b16 %v488
        %v1089 = vunpack.c.l.b16 %v489
        %v1090 = vunpack.c.l.b16 %v490
        %v1091 = vunpack.c.l.b16 %v491
        %v1092 = vunpack.c.l.b16 %v492
        %v1093 = vpack.c.b16 %v1078, %v1077
        %v1094 = vpack.c.b16 %v1080, %v1079
        %v1095 = vpack.c.b16 %v1082, %v1081
        %v1096 = vpack.c.b16 %v1084, %v1083
        %v1097 = vpack.c.b16 %v1086, %v1085
        %v1098 = vpack.c.b16 %v1088, %v1087
        %v1099 = vpack.c.b16 %v1090, %v1089
        %v1100 = vpack.c.b16 %v1092, %v1091
        %1109 = vmatprep.subr.bf16.mxu0 0
        %1110 = vmatpush1.bf16.msra.mxu0 %v1100
        %1111 = vmatprep.subr.bf16.mxu0 0
        %1112 = vmatpush1.bf16.msra.mxu0 %v1099
        %1113 = vmatprep.subr.bf16.mxu0 0
        %1114 = vmatpush1.bf16.msra.mxu0 %v1098
        %1115 = vmatprep.subr.bf16.mxu0 0
        %1116 = vmatpush1.bf16.msra.mxu0 %v1097
        %1117 = vmatprep.subr.bf16.mxu0 0
        %1118 = vmatpush1.bf16.msra.mxu0 %v1096
        %1119 = vmatprep.subr.bf16.mxu0 0
        %1120 = vmatpush1.bf16.msra.mxu0 %v1095
        %1121 = vmatprep.subr.bf16.mxu0 0
        %1122 = vmatpush1.bf16.msra.mxu0 %v1094
        %1123 = vmatprep.subr.bf16.mxu0 0
        %1124 = vmatpush1.bf16.msra.mxu0 %v1093
        %1125 = vmatprep.subr.bf16.mxu0 0
        %1126 = vmatpush2.bf16.msra.mxu0 0
        %1127 = vmatprep.subr.bf16.mxu0 0
        %1128 = vmatpush2.bf16.msra.mxu0 0
        %1129 = vmatprep.subr.bf16.mxu0 0
        %1130 = vmatpush2.bf16.msra.mxu0 0
        %1131 = vmatprep.subr.bf16.mxu0 0
        %1132 = vmatpush2.bf16.msra.mxu0 0
        %1133 = vmatprep.subr.bf16.mxu0 0
        %1134 = vmatpush2.bf16.msra.mxu0 0
        %1135 = vmatprep.subr.bf16.mxu0 0
        %1136 = vmatpush2.bf16.msra.mxu0 0
        %1137 = vmatprep.subr.bf16.mxu0 0
        %1138 = vmatpush2.bf16.msra.mxu0 0
        %1139 = vmatprep.subr.bf16.mxu0 0
        %1140 = vmatpush2.bf16.msra.mxu0 0
        %1141 = vmatprep.mubr.bf16.mxu0 0
        %1142 = vmatmul.mubr.bf16.gmra.mxu0 %v1051
        %v1143 = vpop.f32.mrf.mxu0
        %v1144 = vadd.f32 %v1059, %v1143
        %v1145 = vpop.f32.mrf.mxu0
        %v1146 = vpop.f32.mrf.mxu0
        %v1147 = vadd.f32 %v1059, %v1146
        %v1148 = vpop.f32.mrf.mxu0
        %1149 = vmatprep.mubr.bf16.mxu0 0
        %1150 = vmatmul.mubr.bf16.gmra.mxu0 %v1052
        %v1151 = vpop.f32.mrf.mxu0
        %v1152 = vadd.f32 %v1059, %v1151
        %v1153 = vpop.f32.mrf.mxu0
        %v1154 = vpop.f32.mrf.mxu0
        %v1155 = vadd.f32 %v1059, %v1154
        %v1156 = vpop.f32.mrf.mxu0
        %1157 = vmatprep.mubr.bf16.mxu0 0
        %1158 = vmatmul.mubr.bf16.gmra.mxu0 %v1053
        %v1159 = vpop.f32.mrf.mxu0
        %v1160 = vadd.f32 %v1059, %v1159
        %v1161 = vpop.f32.mrf.mxu0
        %v1162 = vpop.f32.mrf.mxu0
        %v1163 = vadd.f32 %v1059, %v1162
        %v1164 = vpop.f32.mrf.mxu0
        %1165 = vmatprep.mubr.bf16.mxu0 0
        %1166 = vmatmul.mubr.bf16.gmra.mxu0 %v1054
        %v1167 = vpop.f32.mrf.mxu0
        %v1168 = vadd.f32 %v1059, %v1167
        %v1169 = vpop.f32.mrf.mxu0
        %v1170 = vpop.f32.mrf.mxu0
        %v1171 = vadd.f32 %v1059, %v1170
        %v1172 = vpop.f32.mrf.mxu0
        %1173 = vdwg.mxu0
        %v1174 = vadd.f32 %v1144, %v695
        %v1175 = vadd.f32 %v1147, %v696
        %v1176 = vadd.f32 %v1152, %v697
        %v1177 = vadd.f32 %v1155, %v698
        %v1178 = vadd.f32 %v1160, %v699
        %v1179 = vadd.f32 %v1163, %v700
        %v1180 = vadd.f32 %v1168, %v701
        %v1181 = vadd.f32 %v1171, %v702
        %1182 = vst [vmem:[#allocation13] sm:$0xff] %v1174
        %1183 = vst [vmem:[#allocation13 + $0x8] sm:$0xff] %v1175
        %1184 = vst [vmem:[#allocation13 + $0x10] sm:$0xff] %v1176
        %1185 = vst [vmem:[#allocation13 + $0x18] sm:$0xff] %v1177
        %1186 = vst [vmem:[#allocation13 + $0x20] sm:$0xff] %v1178
        %1187 = vst [vmem:[#allocation13 + $0x28] sm:$0xff] %v1179
        %1188 = vst [vmem:[#allocation13 + $0x30] sm:$0xff] %v1180
        %1189 = vst [vmem:[#allocation13 + $0x38] sm:$0xff] %v1181
        // Predicated region
        $region85: #{tpu_custom_call.1} parent=55 // pred_check
          %p1190 = pneg %p249
        $region86: #{tpu_custom_call.1} parent=55 // pred_check_branch
          %1192 = sbr.rel (%p1190) target = $region88
        $region87: #{tpu_custom_call.1} parent=55 // pred_region
          %s1193 = smul.u32 8, %s29
          %s1195 = ssub.s32 1024, 1024
          %1196 = vsyncadd [#allocation4], %s1195
          %s1197 = smul.addr %s1193, 128
          %s1198 = scalar_lea.hbm %s9, %s1197
          %s1199 = sshll.u32 [#allocation13], 4
          %s1200 = int_to_ptr.vmem [resolvable:$true] %s1199
          %1205 = dma.vmem_to_hbm [thread:$0]  %s1200, 1024, %s1198, [#allocation4], 128, 128, 8
        $region88: #{tpu_custom_call.1} parent=55 // pred_fallthru
          _
        // Predicated region
        $region89: #{tpu_custom_call.1} parent=55 // pred_check
          %p1206 = pneg %p249
        $region90: #{tpu_custom_call.1} parent=55 // pred_check_branch
          %1208 = sbr.rel (%p1206) target = $region92
        $region91: #{tpu_custom_call.1} parent=55 // pred_region
          %1209 = dma.done [#allocation4], 1024
        $region92: #{tpu_custom_call.1} parent=55 // pred_fallthru
          _
      $region56: #{tpu_custom_call.1} parent=5 // pred_fallthru
        _
      %p1210 = scmp.le.s32.totalorder 2, %s20
      // Predicated region
      $region93: #{tpu_custom_call.1} parent=5 // pred_check
        %p1211 = pneg %p1210
      $region94: #{tpu_custom_call.1} parent=5 // pred_check_branch
        %1213 = sbr.rel (%p1211) target = $region96
      $region95: #{tpu_custom_call.1} parent=5 // pred_region
        %s1214 = ssub.s32 %s20, 2
      $region96: #{tpu_custom_call.1} parent=5 // pred_fallthru
        _
    $region6: #{tpu_custom_call.1} parent=1 // loop_footer
      %s24 = sadd.s32 1, %s20
    $region7: #{tpu_custom_call.1} parent=1 // loop_footer_branch
      %19 = sbr.rel target = $region3
    $region8: #{tpu_custom_call.1} parent=1 // loop_exit
      _
    %1215 = vsyncpa [#allocation3], 1
    %s1216 = scalar_lea.sflag [#allocation3], 1
    %1217 = vsyncpa %s1216, 1
    %1218 = vsyncpa [#allocation6], 1
    %1219 = vsyncpa [#allocation9], 1
    %1220 = vsyncpa [#allocation12], 1
    %1221 = vsyncpa [#allocation4], 1
    %s1222 = scalar_lea.sflag [#allocation4], 1
    %1223 = vsyncpa %s1222, 1

</llo_original>
